<compile_context>
chip_gen: v7x
topology: tpu7x:2x2x1
jax: 0.10.0
libtpu: 0.0.40
codegen_flags: <defaults>
</compile_context>

<pallas_src>
import functools

import jax
import jax.numpy as jnp
from jax.experimental import pallas as pl
from jax.experimental.pallas import tpu as pltpu

_LANE = 128          # lane width
_SUBLANE_BF16 = 16   # bf16 rows per sublane tile


# ----------------------------------------------------------------------------
# Fused TCN kernel (one batch tile per grid step)
# ----------------------------------------------------------------------------
def _tcn_kernel(x_ref, *refs, dilations, has_downsample, kernel_size):
    """x_ref: (Bt, Lp, C_in) bf16.

    refs = per-block (w1, b1, w2, b2[, wd, bd]) ..., w_lin, b_lin, out_ref.
    Conv weights are (K, Cin, Cout) bf16; biases (1, Cout) f32; w_lin is
    lane-padded to (C_last, out_pad) bf16, b_lin to (1, out_pad) f32.
    """
    o_ref = refs[-1]
    w_refs = refs[:-1]
    Bt, Lp, C_in = x_ref.shape
    K = kernel_size

    # Fold the batch tile into the matmul M dimension; keep f32 activations
    # in-kernel (residual adds stay f32), cast to bf16 only at each matmul.
    x = x_ref[...].reshape(Bt * Lp, C_in).astype(jnp.float32)

    # Per-row time index and ONE causal mask per distinct tap shift, hoisted once
    # and reused everywhere (both convs of a block share the same dilation; JAX
    # does not CSE the broadcast/compare, so this avoids rebuilding it per conv).
    t_idx = jax.lax.broadcasted_iota(jnp.int32, (Bt, Lp, 1), 1).reshape(Bt * Lp, 1)
    shift_set = {(K - 1 - k) * d for d in dilations for k in range(K)}
    shift_set.discard(0)
    masks = {s: (t_idx >= s).astype(jnp.float32)
             for s in sorted(shift_set) if s < Lp}

    def causal_conv(h, w_ref, b_ref, dilation):
        """y[b, t] = b + sum_k h[b, t - (K-1-k)*dilation] @ w[k]  (zero left padding).

        One small MXU matmul per tap, accumulated in f32 (avoids the lane-axis
        concat of non-128-aligned pieces).  Rows whose shifted time index is
        negative would wrap into the previous batch element after the flat roll;
        the hoisted causal mask zeroes them (== left zero padding + Chomp1d).
        """
        out = None
        for k in range(K):
            s = (K - 1 - k) * dilation          # static python int
            if s >= Lp:
                continue                        # tap is entirely zero padding
            if s == 0:
                tap = h.astype(jnp.bfloat16)
            else:
                shifted = pltpu.roll(h, shift=s, axis=0)     # sublane rotate (XLU)
                tap = (shifted * masks[s]).astype(jnp.bfloat16)
            y = jnp.dot(tap, w_ref[k], preferred_element_type=jnp.float32)
            out = y if out is None else out + y
        return out + b_ref[...]

    i = 0
    for dilation, has_ds in zip(dilations, has_downsample):
        w1, b1 = w_refs[i], w_refs[i + 1]
        w2, b2 = w_refs[i + 2], w_refs[i + 3]
        i += 4
        h = jnp.maximum(causal_conv(x, w1, b1, dilation), 0.0)
        # TODO(synk): dropout1/dropout2 are identity here (inference semantics).
        h = jnp.maximum(causal_conv(h, w2, b2, dilation), 0.0)
        if has_ds:
            wd, bd = w_refs[i][...], w_refs[i + 1][...]
            i += 2
            res = jnp.dot(x.astype(wd.dtype), wd,
                          preferred_element_type=jnp.float32) + bd
        else:
            res = x
        x = jnp.maximum(h + res, 0.0)
    # TODO(synk): for deep stacks of identically-shaped blocks, stack their weights
    # and iterate with lax.fori_loop (or a grid axis) to bound live ranges / spills.

    # Final Linear: num_channels[-1] -> out_pad (lane-dense store; padding columns
    # are zero and sliced off in the wrapper).
    w_lin, b_lin = w_refs[i][...], w_refs[i + 1][...]
    o = jnp.dot(x.astype(w_lin.dtype), w_lin,
                preferred_element_type=jnp.float32) + b_lin
    o_ref[...] = o.reshape(Bt, Lp, o.shape[-1]).astype(o_ref.dtype)


# ----------------------------------------------------------------------------
# One-time host-side weight packing (hoisted out of the forward path)
# ----------------------------------------------------------------------------
def pack_tcn_params(params, kernel_size=2):
    """Cast matmul weights to bf16 (f32 accumulation in-kernel), keep biases f32,
    lane-pad the final Linear to a multiple of 128 so the output store is
    unmasked, and record static block metadata."""
    flat_w, dilations, has_ds, channels = [], [], [], []
    for p in params["blocks"]:
        flat_w += [p["w1"].astype(jnp.bfloat16), p["b1"].astype(jnp.float32),
                   p["w2"].astype(jnp.bfloat16), p["b2"].astype(jnp.float32)]
        if p["has_downsample"]:
            flat_w += [p["wd"].astype(jnp.bfloat16), p["bd"].astype(jnp.float32)]
        dilations.append(int(p["dilation"]))
        has_ds.append(bool(p["has_downsample"]))
        channels.append(int(p["w1"].shape[-1]))
    c_last, out_size = params["w_lin"].shape
    out_pad = -(-out_size // _LANE) * _LANE
    w_lin = jnp.zeros((c_last, out_pad), jnp.bfloat16)
    w_lin = w_lin.at[:, :out_size].set(params["w_lin"].astype(jnp.bfloat16))
    b_lin = jnp.zeros((1, out_pad), jnp.float32)
    b_lin = b_lin.at[:, :out_size].set(params["b_lin"].astype(jnp.float32))
    flat_w += [w_lin, b_lin]
    return {
        "flat_w": tuple(flat_w),
        "dilations": tuple(dilations),
        "has_downsample": tuple(has_ds),
        "num_channels": tuple(channels),
        "kernel_size": int(kernel_size),
        "out_size": int(out_size),
        "out_pad": int(out_pad),
    }


# ----------------------------------------------------------------------------
# Tiling / VMEM heuristics
# ----------------------------------------------------------------------------
def _vmem_limit_bytes():
    """Per-generation VMEM budget: ~48 MiB on v7x (64 MiB physical), ~96 MiB on
    v5e/v6e (128 MiB physical); fall back to the 32 MiB scoped default."""
    try:
        cap = int(pltpu.get_tpu_info().vmem_capacity_bytes)
        return min((cap * 3) // 4, 100 * 1024 * 1024)
    except Exception:
        return 32 * 1024 * 1024


def _pick_batch_tile(B, Lp, c_max, vmem_limit_bytes):
    """Pick the batch tile so Bt*Lp hits the ~1k-4k matmul-row sweet spot, stays
    inside an activation VMEM budget, and leaves >= 2 grid steps so the 'parallel'
    axis can shard across both v7x TensorCores."""
    target_rows = 2048
    bt = max(1, target_rows // Lp)
    act_budget = max(vmem_limit_bytes // 2, 4 * 1024 * 1024)
    # ~8 live f32 (rows, c_max) buffers (x, taps, conv outs, residual, matmul tmp).
    rows_cap = max(Lp, act_budget // (8 * c_max * 4))
    bt = min(bt, max(1, rows_cap // Lp))
    if B >= 2:
        bt = min(bt, -(-B // 2))   # ceil(B/2) -> >= 2 parallel grid steps
    return max(1, min(bt, B))


# ----------------------------------------------------------------------------
# Wrapper
# ----------------------------------------------------------------------------
def tcn_forward(inputs, packed, batch_tile=None):
    """TCN.forward: inputs (N, L, input_size) -> (N, L, output_size)."""
    B, L, C_in = inputs.shape
    out_size, out_pad = packed["out_size"], packed["out_pad"]

    # Pad L so in-kernel (Bt*L, C) reshapes never split a sublane tile
    # (bf16 activations pack 16 rows per (16,128) tile). Padded (later-time) rows
    # are never read by the causal convs of real rows and are sliced off.
    Lp = -(-L // _SUBLANE_BF16) * _SUBLANE_BF16

    vmem_limit = _vmem_limit_bytes()
    c_max = max([C_in, out_pad, *packed["num_channels"]])
    if batch_tile is None:
        batch_tile = _pick_batch_tile(B, Lp, c_max, vmem_limit)
    num_tiles = -(-B // batch_tile)
    Bp = num_tiles * batch_tile

    # bf16 activation DMA: the input/output tiles are the only large HBM transfers.
    x = inputs.astype(jnp.bfloat16)
    if Bp != B or Lp != L:
        x = jnp.pad(x, ((0, Bp - B), (0, Lp - L), (0, 0)))

    kern = functools.partial(_tcn_kernel,
                             dilations=packed["dilations"],
                             has_downsample=packed["has_downsample"],
                             kernel_size=packed["kernel_size"])
    # Weights: whole-array VMEM residents (constant block index across the grid,
    # so no per-step re-DMA / double buffering).
    vmem_full = pl.BlockSpec(memory_space=pltpu.MemorySpace.VMEM)

    out = pl.pallas_call(
        kern,
        out_shape=jax.ShapeDtypeStruct((Bp, Lp, out_pad), jnp.float32),
        grid=(num_tiles,),
        in_specs=[pl.BlockSpec((batch_tile, Lp, C_in), lambda b: (b, 0, 0))]
                 + [vmem_full] * len(packed["flat_w"]),
        out_specs=pl.BlockSpec((batch_tile, Lp, out_pad), lambda b: (b, 0, 0)),
        compiler_params=pltpu.CompilerParams(
            dimension_semantics=("parallel",),
            vmem_limit_bytes=vmem_limit,
        ),
    )(x, *packed["flat_w"])
    # TODO(synk): for very long sequences, additionally tile L with a
    # receptive-field halo (2*(K-1)*dilation per block) to respect v7x VMEM.
    return out[:B, :L, :out_size]


# ----------------------------------------------------------------------------
# Deterministic parameter init (shapes match the nn.Module __init__).
# weight_norm at init yields effective weight == v, so effective weights are
# materialized directly with w ~ N(0, 0.01) as in init_weights().
# ----------------------------------------------------------------------------
def init_tcn_params(key, input_size, output_size, num_channels, kernel_size=2):
    blocks = []
    for i, out_ch in enumerate(num_channels):
        in_ch = input_size if i == 0 else num_channels[i - 1]
        key, k1, k2, k3, k4, k5, k6 = jax.random.split(key, 7)
        blk = {
            "dilation": 2 ** i,
            "has_downsample": in_ch != out_ch,
            # conv weights stored as (K, Cin, Cout): w[k, i, o] == torch W[o, i, k]
            "w1": 0.01 * jax.random.normal(k1, (kernel_size, in_ch, out_ch), jnp.float32),
            "b1": 0.05 * jax.random.normal(k2, (1, out_ch), jnp.float32),
            "w2": 0.01 * jax.random.normal(k3, (kernel_size, out_ch, out_ch), jnp.float32),
            "b2": 0.05 * jax.random.normal(k4, (1, out_ch), jnp.float32),
        }
        if blk["has_downsample"]:
            blk["wd"] = 0.01 * jax.random.normal(k5, (in_ch, out_ch), jnp.float32)
            blk["bd"] = 0.05 * jax.random.normal(k6, (1, out_ch), jnp.float32)
        blocks.append(blk)
    key, kw, kb = jax.random.split(key, 3)
    c_last = num_channels[-1]
    bound = 1.0 / (c_last ** 0.5)
    return {
        "blocks": blocks,
        "w_lin": jax.random.uniform(kw, (c_last, output_size), jnp.float32, -bound, bound),
        "b_lin": jax.random.uniform(kb, (1, output_size), jnp.float32, -bound, bound),
    }


# ----------------------------------------------------------------------------
# Pure-JAX f32 reference mirroring the PyTorch module (Conv1d + Chomp1d + ReLU
# blocks, residual, final Linear, including TCN.forward's transposes).
# ----------------------------------------------------------------------------
def _ref_causal_conv(x_ncl, w_kio, b, dilation):
    L = x_ncl.shape[2]
    K = w_kio.shape[0]
    pad = (K - 1) * dilation
    w_oik = jnp.transpose(w_kio, (2, 1, 0))  # (Cout, Cin, K) like PyTorch
    y = jax.lax.conv_general_dilated(
        x_ncl, w_oik, window_strides=(1,), padding=[(pad, pad)],
        rhs_dilation=(dilation,), dimension_numbers=("NCH", "OIH", "NCH"))
    y = y[:, :, :L]  # Chomp1d
    return y + b.reshape(1, -1, 1)


def tcn_reference(inputs, params):
    h = jnp.transpose(inputs, (0, 2, 1))     # inputs.transpose(-1, 1): (N, C_in, L)
    for p in params["blocks"]:
        x_in = h
        z = jnp.maximum(_ref_causal_conv(x_in, p["w1"], p["b1"], p["dilation"]), 0.0)
        z = jnp.maximum(_ref_causal_conv(z, p["w2"], p["b2"], p["dilation"]), 0.0)
        if p["has_downsample"]:
            res = jnp.einsum("bcl,cd->bdl", x_in, p["wd"]) + p["bd"].reshape(1, -1, 1)
        else:
            res = x_in
        h = jnp.maximum(z + res, 0.0)
    y1t = jnp.transpose(h, (0, 2, 1))         # y1.transpose(-1, 1): (N, L, C_last)
    return y1t @ params["w_lin"] + params["b_lin"]


# ----------------------------------------------------------------------------
if __name__ == "__main__":
    key = jax.random.PRNGKey(0)
    kparam, kx = jax.random.split(key)

    B, L = 2, 16                      # TCN.forward input: (N, L, input_size)
    input_size, output_size = 4, 6
    num_channels = [8, 8, 16]         # dilations 1, 2, 4; blocks with & without downsample
    kernel_size = 2

    params = init_tcn_params(kparam, input_size, output_size, num_channels, kernel_size)
    packed = pack_tcn_params(params, kernel_size)   # one-time host-side weight prep
    x = jax.random.normal(kx, (B, L, input_size), jnp.float32)

    out = tcn_forward(x, packed)
    out = jax.block_until_ready(out)

    ref = tcn_reference(x, params)
    assert out.shape == (B, L, output_size), out.shape
    max_err = float(jnp.max(jnp.abs(out - ref)))
    # bf16 matmul operands / bf16 activation DMA with f32 accumulation vs f32 ref.
    assert jnp.allclose(out, ref, atol=2e-2, rtol=2e-2), max_err

    print("KERNEL_OK")
</pallas_src>

<mosaic_0001>
module attributes {stable_mosaic.version = 11 : i64} {
  func.func @_tcn_kernel(%arg0: i32, %arg1: memref<1x16x4xbf16, #tpu.memory_space<vmem>>, %arg2: memref<2x4x8xbf16, #tpu.memory_space<vmem>>, %arg3: memref<1x8xf32, #tpu.memory_space<vmem>>, %arg4: memref<2x8x8xbf16, #tpu.memory_space<vmem>>, %arg5: memref<1x8xf32, #tpu.memory_space<vmem>>, %arg6: memref<4x8xbf16, #tpu.memory_space<vmem>>, %arg7: memref<1x8xf32, #tpu.memory_space<vmem>>, %arg8: memref<2x8x8xbf16, #tpu.memory_space<vmem>>, %arg9: memref<1x8xf32, #tpu.memory_space<vmem>>, %arg10: memref<2x8x8xbf16, #tpu.memory_space<vmem>>, %arg11: memref<1x8xf32, #tpu.memory_space<vmem>>, %arg12: memref<2x8x16xbf16, #tpu.memory_space<vmem>>, %arg13: memref<1x16xf32, #tpu.memory_space<vmem>>, %arg14: memref<2x16x16xbf16, #tpu.memory_space<vmem>>, %arg15: memref<1x16xf32, #tpu.memory_space<vmem>>, %arg16: memref<8x16xbf16, #tpu.memory_space<vmem>>, %arg17: memref<1x16xf32, #tpu.memory_space<vmem>>, %arg18: memref<16x128xbf16, #tpu.memory_space<vmem>>, %arg19: memref<1x128xf32, #tpu.memory_space<vmem>>, %arg20: memref<1x16x128xf32, #tpu.memory_space<vmem>>) attributes {dimension_semantics = [#tpu.dimension_semantics<parallel>], iteration_bounds = array<i64: 2>, scalar_prefetch = 0 : i64, scratch_operands = 0 : i64, tpu.core_type = #tpu.core_type<tc>, window_params = [{transform_indices = @transform_0, window_bounds = array<i64: 1, 16, 4>}, {pipeline_mode = #tpu.pipeline_mode<synchronous>, transform_indices = @transform_1, window_bounds = array<i64: 2, 4, 8>}, {pipeline_mode = #tpu.pipeline_mode<synchronous>, transform_indices = @transform_2, window_bounds = array<i64: 1, 8>}, {pipeline_mode = #tpu.pipeline_mode<synchronous>, transform_indices = @transform_3, window_bounds = array<i64: 2, 8, 8>}, {pipeline_mode = #tpu.pipeline_mode<synchronous>, transform_indices = @transform_4, window_bounds = array<i64: 1, 8>}, {pipeline_mode = #tpu.pipeline_mode<synchronous>, transform_indices = @transform_5, window_bounds = array<i64: 4, 8>}, {pipeline_mode = #tpu.pipeline_mode<synchronous>, transform_indices = @transform_6, window_bounds = array<i64: 1, 8>}, {pipeline_mode = #tpu.pipeline_mode<synchronous>, transform_indices = @transform_7, window_bounds = array<i64: 2, 8, 8>}, {pipeline_mode = #tpu.pipeline_mode<synchronous>, transform_indices = @transform_8, window_bounds = array<i64: 1, 8>}, {pipeline_mode = #tpu.pipeline_mode<synchronous>, transform_indices = @transform_9, window_bounds = array<i64: 2, 8, 8>}, {pipeline_mode = #tpu.pipeline_mode<synchronous>, transform_indices = @transform_10, window_bounds = array<i64: 1, 8>}, {pipeline_mode = #tpu.pipeline_mode<synchronous>, transform_indices = @transform_11, window_bounds = array<i64: 2, 8, 16>}, {pipeline_mode = #tpu.pipeline_mode<synchronous>, transform_indices = @transform_12, window_bounds = array<i64: 1, 16>}, {pipeline_mode = #tpu.pipeline_mode<synchronous>, transform_indices = @transform_13, window_bounds = array<i64: 2, 16, 16>}, {pipeline_mode = #tpu.pipeline_mode<synchronous>, transform_indices = @transform_14, window_bounds = array<i64: 1, 16>}, {pipeline_mode = #tpu.pipeline_mode<synchronous>, transform_indices = @transform_15, window_bounds = array<i64: 8, 16>}, {pipeline_mode = #tpu.pipeline_mode<synchronous>, transform_indices = @transform_16, window_bounds = array<i64: 1, 16>}, {pipeline_mode = #tpu.pipeline_mode<synchronous>, transform_indices = @transform_17, window_bounds = array<i64: 16, 128>}, {pipeline_mode = #tpu.pipeline_mode<synchronous>, transform_indices = @transform_18, window_bounds = array<i64: 1, 128>}, {transform_indices = @transform_19, window_bounds = array<i64: 1, 16, 128>}]} {
    %c0 = arith.constant 0 : index
    %c0_0 = arith.constant 0 : index
    %c0_1 = arith.constant 0 : index
    %0 = vector.load %arg1[%c0, %c0_0, %c0_1] : memref<1x16x4xbf16, #tpu.memory_space<vmem>>, vector<1x16x4xbf16>
    %1 = vector.shape_cast %0 : vector<1x16x4xbf16> to vector<16x4xbf16>
    %2 = arith.extf %1 : vector<16x4xbf16> to vector<16x4xf32>
    %3 = tpu.iota {dimensions = array<i32: 1>} : vector<1x16x1xi32>
    %4 = vector.shape_cast %3 : vector<1x16x1xi32> to vector<16x1xi32>
    %c1_i32 = arith.constant 1 : i32
    %5 = vector.broadcast %c1_i32 : i32 to vector<16x1xi32>
    %6 = arith.cmpi sge, %4, %5 : vector<16x1xi32>
    %7 = arith.extui %6 : vector<16x1xi1> to vector<16x1xi32>
    %8 = arith.sitofp %7 : vector<16x1xi32> to vector<16x1xf32>
    %c2_i32 = arith.constant 2 : i32
    %9 = vector.broadcast %c2_i32 : i32 to vector<16x1xi32>
    %10 = arith.cmpi sge, %4, %9 : vector<16x1xi32>
    %11 = arith.extui %10 : vector<16x1xi1> to vector<16x1xi32>
    %12 = arith.sitofp %11 : vector<16x1xi32> to vector<16x1xf32>
    %c4_i32 = arith.constant 4 : i32
    %13 = vector.broadcast %c4_i32 : i32 to vector<16x1xi32>
    %14 = arith.cmpi sge, %4, %13 : vector<16x1xi32>
    %15 = arith.extui %14 : vector<16x1xi1> to vector<16x1xi32>
    %16 = arith.sitofp %15 : vector<16x1xi32> to vector<16x1xf32>
    %c1_i32_2 = arith.constant 1 : i32
    %17 = tpu.dynamic_rotate %2 by %c1_i32_2 dim 0 : vector<16x4xf32>, i32 -> vector<16x4xf32>
    %18 = vector.broadcast %8 : vector<16x1xf32> to vector<16x4xf32>
    %19 = arith.mulf %17, %18 : vector<16x4xf32>
    %20 = arith.truncf %19 : vector<16x4xf32> to vector<16x4xbf16>
    %c0_3 = arith.constant 0 : index
    %c0_4 = arith.constant 0 : index
    %c0_5 = arith.constant 0 : index
    %21 = vector.load %arg2[%c0_3, %c0_4, %c0_5] : memref<2x4x8xbf16, #tpu.memory_space<vmem>>, vector<1x4x8xbf16>
    %22 = vector.shape_cast %21 : vector<1x4x8xbf16> to vector<4x8xbf16>
    %cst = arith.constant dense<0.000000e+00> : vector<16x8xf32>
    %23 = tpu.matmul %20, %22, %cst {dimension_numbers = #tpu.dot_dimension_numbers<[1], [0], [0], [1], [0, 0, 1, 1], [], []>} : vector<16x4xbf16>, vector<4x8xbf16>, vector<16x8xf32> -> vector<16x8xf32>
    %24 = arith.truncf %2 : vector<16x4xf32> to vector<16x4xbf16>
    %c1 = arith.constant 1 : index
    %c0_6 = arith.constant 0 : index
    %c0_7 = arith.constant 0 : index
    %25 = vector.load %arg2[%c1, %c0_6, %c0_7] : memref<2x4x8xbf16, #tpu.memory_space<vmem>>, vector<1x4x8xbf16>
    %26 = vector.shape_cast %25 : vector<1x4x8xbf16> to vector<4x8xbf16>
    %cst_8 = arith.constant dense<0.000000e+00> : vector<16x8xf32>
    %27 = tpu.matmul %24, %26, %cst_8 {dimension_numbers = #tpu.dot_dimension_numbers<[1], [0], [0], [1], [0, 0, 1, 1], [], []>} : vector<16x4xbf16>, vector<4x8xbf16>, vector<16x8xf32> -> vector<16x8xf32>
    %28 = arith.addf %23, %27 : vector<16x8xf32>
    %c0_9 = arith.constant 0 : index
    %c0_10 = arith.constant 0 : index
    %29 = vector.load %arg3[%c0_9, %c0_10] : memref<1x8xf32, #tpu.memory_space<vmem>>, vector<1x8xf32>
    %30 = vector.broadcast %29 : vector<1x8xf32> to vector<16x8xf32>
    %31 = arith.addf %28, %30 : vector<16x8xf32>
    %cst_11 = arith.constant 0.000000e+00 : f32
    %32 = vector.broadcast %cst_11 : f32 to vector<16x8xf32>
    %33 = arith.maximumf %31, %32 : vector<16x8xf32>
    %c1_i32_12 = arith.constant 1 : i32
    %34 = tpu.dynamic_rotate %33 by %c1_i32_12 dim 0 : vector<16x8xf32>, i32 -> vector<16x8xf32>
    %35 = vector.broadcast %8 : vector<16x1xf32> to vector<16x8xf32>
    %36 = arith.mulf %34, %35 : vector<16x8xf32>
    %37 = arith.truncf %36 : vector<16x8xf32> to vector<16x8xbf16>
    %c0_13 = arith.constant 0 : index
    %c0_14 = arith.constant 0 : index
    %c0_15 = arith.constant 0 : index
    %38 = vector.load %arg4[%c0_13, %c0_14, %c0_15] : memref<2x8x8xbf16, #tpu.memory_space<vmem>>, vector<1x8x8xbf16>
    %39 = vector.shape_cast %38 : vector<1x8x8xbf16> to vector<8x8xbf16>
    %cst_16 = arith.constant dense<0.000000e+00> : vector<16x8xf32>
    %40 = tpu.matmul %37, %39, %cst_16 {dimension_numbers = #tpu.dot_dimension_numbers<[1], [0], [0], [1], [0, 0, 1, 1], [], []>} : vector<16x8xbf16>, vector<8x8xbf16>, vector<16x8xf32> -> vector<16x8xf32>
    %41 = arith.truncf %33 : vector<16x8xf32> to vector<16x8xbf16>
    %c1_17 = arith.constant 1 : index
    %c0_18 = arith.constant 0 : index
    %c0_19 = arith.constant 0 : index
    %42 = vector.load %arg4[%c1_17, %c0_18, %c0_19] : memref<2x8x8xbf16, #tpu.memory_space<vmem>>, vector<1x8x8xbf16>
    %43 = vector.shape_cast %42 : vector<1x8x8xbf16> to vector<8x8xbf16>
    %cst_20 = arith.constant dense<0.000000e+00> : vector<16x8xf32>
    %44 = tpu.matmul %41, %43, %cst_20 {dimension_numbers = #tpu.dot_dimension_numbers<[1], [0], [0], [1], [0, 0, 1, 1], [], []>} : vector<16x8xbf16>, vector<8x8xbf16>, vector<16x8xf32> -> vector<16x8xf32>
    %45 = arith.addf %40, %44 : vector<16x8xf32>
    %c0_21 = arith.constant 0 : index
    %c0_22 = arith.constant 0 : index
    %46 = vector.load %arg5[%c0_21, %c0_22] : memref<1x8xf32, #tpu.memory_space<vmem>>, vector<1x8xf32>
    %47 = vector.broadcast %46 : vector<1x8xf32> to vector<16x8xf32>
    %48 = arith.addf %45, %47 : vector<16x8xf32>
    %cst_23 = arith.constant 0.000000e+00 : f32
    %49 = vector.broadcast %cst_23 : f32 to vector<16x8xf32>
    %50 = arith.maximumf %48, %49 : vector<16x8xf32>
    %c0_24 = arith.constant 0 : index
    %c0_25 = arith.constant 0 : index
    %51 = vector.load %arg6[%c0_24, %c0_25] : memref<4x8xbf16, #tpu.memory_space<vmem>>, vector<4x8xbf16>
    %c0_26 = arith.constant 0 : index
    %c0_27 = arith.constant 0 : index
    %52 = vector.load %arg7[%c0_26, %c0_27] : memref<1x8xf32, #tpu.memory_space<vmem>>, vector<1x8xf32>
    %53 = arith.truncf %2 : vector<16x4xf32> to vector<16x4xbf16>
    %cst_28 = arith.constant dense<0.000000e+00> : vector<16x8xf32>
    %54 = tpu.matmul %53, %51, %cst_28 {dimension_numbers = #tpu.dot_dimension_numbers<[1], [0], [0], [1], [0, 0, 1, 1], [], []>} : vector<16x4xbf16>, vector<4x8xbf16>, vector<16x8xf32> -> vector<16x8xf32>
    %55 = vector.broadcast %52 : vector<1x8xf32> to vector<16x8xf32>
    %56 = arith.addf %54, %55 : vector<16x8xf32>
    %57 = arith.addf %50, %56 : vector<16x8xf32>
    %cst_29 = arith.constant 0.000000e+00 : f32
    %58 = vector.broadcast %cst_29 : f32 to vector<16x8xf32>
    %59 = arith.maximumf %57, %58 : vector<16x8xf32>
    %c2_i32_30 = arith.constant 2 : i32
    %60 = tpu.dynamic_rotate %59 by %c2_i32_30 dim 0 : vector<16x8xf32>, i32 -> vector<16x8xf32>
    %61 = vector.broadcast %12 : vector<16x1xf32> to vector<16x8xf32>
    %62 = arith.mulf %60, %61 : vector<16x8xf32>
    %63 = arith.truncf %62 : vector<16x8xf32> to vector<16x8xbf16>
    %c0_31 = arith.constant 0 : index
    %c0_32 = arith.constant 0 : index
    %c0_33 = arith.constant 0 : index
    %64 = vector.load %arg8[%c0_31, %c0_32, %c0_33] : memref<2x8x8xbf16, #tpu.memory_space<vmem>>, vector<1x8x8xbf16>
    %65 = vector.shape_cast %64 : vector<1x8x8xbf16> to vector<8x8xbf16>
    %cst_34 = arith.constant dense<0.000000e+00> : vector<16x8xf32>
    %66 = tpu.matmul %63, %65, %cst_34 {dimension_numbers = #tpu.dot_dimension_numbers<[1], [0], [0], [1], [0, 0, 1, 1], [], []>} : vector<16x8xbf16>, vector<8x8xbf16>, vector<16x8xf32> -> vector<16x8xf32>
    %67 = arith.truncf %59 : vector<16x8xf32> to vector<16x8xbf16>
    %c1_35 = arith.constant 1 : index
    %c0_36 = arith.constant 0 : index
    %c0_37 = arith.constant 0 : index
    %68 = vector.load %arg8[%c1_35, %c0_36, %c0_37] : memref<2x8x8xbf16, #tpu.memory_space<vmem>>, vector<1x8x8xbf16>
    %69 = vector.shape_cast %68 : vector<1x8x8xbf16> to vector<8x8xbf16>
    %cst_38 = arith.constant dense<0.000000e+00> : vector<16x8xf32>
    %70 = tpu.matmul %67, %69, %cst_38 {dimension_numbers = #tpu.dot_dimension_numbers<[1], [0], [0], [1], [0, 0, 1, 1], [], []>} : vector<16x8xbf16>, vector<8x8xbf16>, vector<16x8xf32> -> vector<16x8xf32>
    %71 = arith.addf %66, %70 : vector<16x8xf32>
    %c0_39 = arith.constant 0 : index
    %c0_40 = arith.constant 0 : index
    %72 = vector.load %arg9[%c0_39, %c0_40] : memref<1x8xf32, #tpu.memory_space<vmem>>, vector<1x8xf32>
    %73 = vector.broadcast %72 : vector<1x8xf32> to vector<16x8xf32>
    %74 = arith.addf %71, %73 : vector<16x8xf32>
    %cst_41 = arith.constant 0.000000e+00 : f32
    %75 = vector.broadcast %cst_41 : f32 to vector<16x8xf32>
    %76 = arith.maximumf %74, %75 : vector<16x8xf32>
    %c2_i32_42 = arith.constant 2 : i32
    %77 = tpu.dynamic_rotate %76 by %c2_i32_42 dim 0 : vector<16x8xf32>, i32 -> vector<16x8xf32>
    %78 = vector.broadcast %12 : vector<16x1xf32> to vector<16x8xf32>
    %79 = arith.mulf %77, %78 : vector<16x8xf32>
    %80 = arith.truncf %79 : vector<16x8xf32> to vector<16x8xbf16>
    %c0_43 = arith.constant 0 : index
    %c0_44 = arith.constant 0 : index
    %c0_45 = arith.constant 0 : index
    %81 = vector.load %arg10[%c0_43, %c0_44, %c0_45] : memref<2x8x8xbf16, #tpu.memory_space<vmem>>, vector<1x8x8xbf16>
    %82 = vector.shape_cast %81 : vector<1x8x8xbf16> to vector<8x8xbf16>
    %cst_46 = arith.constant dense<0.000000e+00> : vector<16x8xf32>
    %83 = tpu.matmul %80, %82, %cst_46 {dimension_numbers = #tpu.dot_dimension_numbers<[1], [0], [0], [1], [0, 0, 1, 1], [], []>} : vector<16x8xbf16>, vector<8x8xbf16>, vector<16x8xf32> -> vector<16x8xf32>
    %84 = arith.truncf %76 : vector<16x8xf32> to vector<16x8xbf16>
    %c1_47 = arith.constant 1 : index
    %c0_48 = arith.constant 0 : index
    %c0_49 = arith.constant 0 : index
    %85 = vector.load %arg10[%c1_47, %c0_48, %c0_49] : memref<2x8x8xbf16, #tpu.memory_space<vmem>>, vector<1x8x8xbf16>
    %86 = vector.shape_cast %85 : vector<1x8x8xbf16> to vector<8x8xbf16>
    %cst_50 = arith.constant dense<0.000000e+00> : vector<16x8xf32>
    %87 = tpu.matmul %84, %86, %cst_50 {dimension_numbers = #tpu.dot_dimension_numbers<[1], [0], [0], [1], [0, 0, 1, 1], [], []>} : vector<16x8xbf16>, vector<8x8xbf16>, vector<16x8xf32> -> vector<16x8xf32>
    %88 = arith.addf %83, %87 : vector<16x8xf32>
    %c0_51 = arith.constant 0 : index
    %c0_52 = arith.constant 0 : index
    %89 = vector.load %arg11[%c0_51, %c0_52] : memref<1x8xf32, #tpu.memory_space<vmem>>, vector<1x8xf32>
    %90 = vector.broadcast %89 : vector<1x8xf32> to vector<16x8xf32>
    %91 = arith.addf %88, %90 : vector<16x8xf32>
    %cst_53 = arith.constant 0.000000e+00 : f32
    %92 = vector.broadcast %cst_53 : f32 to vector<16x8xf32>
    %93 = arith.maximumf %91, %92 : vector<16x8xf32>
    %94 = arith.addf %93, %59 : vector<16x8xf32>
    %cst_54 = arith.constant 0.000000e+00 : f32
    %95 = vector.broadcast %cst_54 : f32 to vector<16x8xf32>
    %96 = arith.maximumf %94, %95 : vector<16x8xf32>
    %c4_i32_55 = arith.constant 4 : i32
    %97 = tpu.dynamic_rotate %96 by %c4_i32_55 dim 0 : vector<16x8xf32>, i32 -> vector<16x8xf32>
    %98 = vector.broadcast %16 : vector<16x1xf32> to vector<16x8xf32>
    %99 = arith.mulf %97, %98 : vector<16x8xf32>
    %100 = arith.truncf %99 : vector<16x8xf32> to vector<16x8xbf16>
    %c0_56 = arith.constant 0 : index
    %c0_57 = arith.constant 0 : index
    %c0_58 = arith.constant 0 : index
    %101 = vector.load %arg12[%c0_56, %c0_57, %c0_58] : memref<2x8x16xbf16, #tpu.memory_space<vmem>>, vector<1x8x16xbf16>
    %102 = vector.shape_cast %101 : vector<1x8x16xbf16> to vector<8x16xbf16>
    %cst_59 = arith.constant dense<0.000000e+00> : vector<16x16xf32>
    %103 = tpu.matmul %100, %102, %cst_59 {dimension_numbers = #tpu.dot_dimension_numbers<[1], [0], [0], [1], [0, 0, 1, 1], [], []>} : vector<16x8xbf16>, vector<8x16xbf16>, vector<16x16xf32> -> vector<16x16xf32>
    %104 = arith.truncf %96 : vector<16x8xf32> to vector<16x8xbf16>
    %c1_60 = arith.constant 1 : index
    %c0_61 = arith.constant 0 : index
    %c0_62 = arith.constant 0 : index
    %105 = vector.load %arg12[%c1_60, %c0_61, %c0_62] : memref<2x8x16xbf16, #tpu.memory_space<vmem>>, vector<1x8x16xbf16>
    %106 = vector.shape_cast %105 : vector<1x8x16xbf16> to vector<8x16xbf16>
    %cst_63 = arith.constant dense<0.000000e+00> : vector<16x16xf32>
    %107 = tpu.matmul %104, %106, %cst_63 {dimension_numbers = #tpu.dot_dimension_numbers<[1], [0], [0], [1], [0, 0, 1, 1], [], []>} : vector<16x8xbf16>, vector<8x16xbf16>, vector<16x16xf32> -> vector<16x16xf32>
    %108 = arith.addf %103, %107 : vector<16x16xf32>
    %c0_64 = arith.constant 0 : index
    %c0_65 = arith.constant 0 : index
    %109 = vector.load %arg13[%c0_64, %c0_65] : memref<1x16xf32, #tpu.memory_space<vmem>>, vector<1x16xf32>
    %110 = vector.broadcast %109 : vector<1x16xf32> to vector<16x16xf32>
    %111 = arith.addf %108, %110 : vector<16x16xf32>
    %cst_66 = arith.constant 0.000000e+00 : f32
    %112 = vector.broadcast %cst_66 : f32 to vector<16x16xf32>
    %113 = arith.maximumf %111, %112 : vector<16x16xf32>
    %c4_i32_67 = arith.constant 4 : i32
    %114 = tpu.dynamic_rotate %113 by %c4_i32_67 dim 0 : vector<16x16xf32>, i32 -> vector<16x16xf32>
    %115 = vector.broadcast %16 : vector<16x1xf32> to vector<16x16xf32>
    %116 = arith.mulf %114, %115 : vector<16x16xf32>
    %117 = arith.truncf %116 : vector<16x16xf32> to vector<16x16xbf16>
    %c0_68 = arith.constant 0 : index
    %c0_69 = arith.constant 0 : index
    %c0_70 = arith.constant 0 : index
    %118 = vector.load %arg14[%c0_68, %c0_69, %c0_70] : memref<2x16x16xbf16, #tpu.memory_space<vmem>>, vector<1x16x16xbf16>
    %119 = vector.shape_cast %118 : vector<1x16x16xbf16> to vector<16x16xbf16>
    %cst_71 = arith.constant dense<0.000000e+00> : vector<16x16xf32>
    %120 = tpu.matmul %117, %119, %cst_71 {dimension_numbers = #tpu.dot_dimension_numbers<[1], [0], [0], [1], [0, 0, 1, 1], [], []>} : vector<16x16xbf16>, vector<16x16xbf16>, vector<16x16xf32> -> vector<16x16xf32>
    %121 = arith.truncf %113 : vector<16x16xf32> to vector<16x16xbf16>
    %c1_72 = arith.constant 1 : index
    %c0_73 = arith.constant 0 : index
    %c0_74 = arith.constant 0 : index
    %122 = vector.load %arg14[%c1_72, %c0_73, %c0_74] : memref<2x16x16xbf16, #tpu.memory_space<vmem>>, vector<1x16x16xbf16>
    %123 = vector.shape_cast %122 : vector<1x16x16xbf16> to vector<16x16xbf16>
    %cst_75 = arith.constant dense<0.000000e+00> : vector<16x16xf32>
    %124 = tpu.matmul %121, %123, %cst_75 {dimension_numbers = #tpu.dot_dimension_numbers<[1], [0], [0], [1], [0, 0, 1, 1], [], []>} : vector<16x16xbf16>, vector<16x16xbf16>, vector<16x16xf32> -> vector<16x16xf32>
    %125 = arith.addf %120, %124 : vector<16x16xf32>
    %c0_76 = arith.constant 0 : index
    %c0_77 = arith.constant 0 : index
    %126 = vector.load %arg15[%c0_76, %c0_77] : memref<1x16xf32, #tpu.memory_space<vmem>>, vector<1x16xf32>
    %127 = vector.broadcast %126 : vector<1x16xf32> to vector<16x16xf32>
    %128 = arith.addf %125, %127 : vector<16x16xf32>
    %cst_78 = arith.constant 0.000000e+00 : f32
    %129 = vector.broadcast %cst_78 : f32 to vector<16x16xf32>
    %130 = arith.maximumf %128, %129 : vector<16x16xf32>
    %c0_79 = arith.constant 0 : index
    %c0_80 = arith.constant 0 : index
    %131 = vector.load %arg16[%c0_79, %c0_80] : memref<8x16xbf16, #tpu.memory_space<vmem>>, vector<8x16xbf16>
    %c0_81 = arith.constant 0 : index
    %c0_82 = arith.constant 0 : index
    %132 = vector.load %arg17[%c0_81, %c0_82] : memref<1x16xf32, #tpu.memory_space<vmem>>, vector<1x16xf32>
    %133 = arith.truncf %96 : vector<16x8xf32> to vector<16x8xbf16>
    %cst_83 = arith.constant dense<0.000000e+00> : vector<16x16xf32>
    %134 = tpu.matmul %133, %131, %cst_83 {dimension_numbers = #tpu.dot_dimension_numbers<[1], [0], [0], [1], [0, 0, 1, 1], [], []>} : vector<16x8xbf16>, vector<8x16xbf16>, vector<16x16xf32> -> vector<16x16xf32>
    %135 = vector.broadcast %132 : vector<1x16xf32> to vector<16x16xf32>
    %136 = arith.addf %134, %135 : vector<16x16xf32>
    %137 = arith.addf %130, %136 : vector<16x16xf32>
    %cst_84 = arith.constant 0.000000e+00 : f32
    %138 = vector.broadcast %cst_84 : f32 to vector<16x16xf32>
    %139 = arith.maximumf %137, %138 : vector<16x16xf32>
    %c0_85 = arith.constant 0 : index
    %c0_86 = arith.constant 0 : index
    %140 = vector.load %arg18[%c0_85, %c0_86] : memref<16x128xbf16, #tpu.memory_space<vmem>>, vector<16x128xbf16>
    %c0_87 = arith.constant 0 : index
    %c0_88 = arith.constant 0 : index
    %141 = vector.load %arg19[%c0_87, %c0_88] : memref<1x128xf32, #tpu.memory_space<vmem>>, vector<1x128xf32>
    %142 = arith.truncf %139 : vector<16x16xf32> to vector<16x16xbf16>
    %cst_89 = arith.constant dense<0.000000e+00> : vector<16x128xf32>
    %143 = tpu.matmul %142, %140, %cst_89 {dimension_numbers = #tpu.dot_dimension_numbers<[1], [0], [0], [1], [0, 0, 1, 1], [], []>} : vector<16x16xbf16>, vector<16x128xbf16>, vector<16x128xf32> -> vector<16x128xf32>
    %144 = vector.broadcast %141 : vector<1x128xf32> to vector<16x128xf32>
    %145 = arith.addf %143, %144 : vector<16x128xf32>
    %146 = vector.shape_cast %145 : vector<16x128xf32> to vector<1x16x128xf32>
    %c0_90 = arith.constant 0 : index
    %c0_91 = arith.constant 0 : index
    %c0_92 = arith.constant 0 : index
    %147 = vector.load %arg20[%c0_90, %c0_91, %c0_92] : memref<1x16x128xf32, #tpu.memory_space<vmem>>, vector<1x16x128xf32>
    tpu.vector_store %arg20[%c0_90, %c0_91, %c0_92], %146 {strides = array<i32>} : memref<1x16x128xf32, #tpu.memory_space<vmem>>, vector<1x16x128xf32>,
    return
  }
  func.func @transform_0(%arg0: i32) -> (i32, i32, i32) {
    %c0_i32 = arith.constant 0 : i32
    %c0_i32_0 = arith.constant 0 : i32
    %c0_i32_1 = arith.constant 0 : i32
    return %arg0, %c0_i32, %c0_i32_0 : i32, i32, i32
  }
  func.func @transform_1(%arg0: i32) -> (i32, i32, i32) {
    %c0_i32 = arith.constant 0 : i32
    %c0_i32_0 = arith.constant 0 : i32
    %c0_i32_1 = arith.constant 0 : i32
    %c0_i32_2 = arith.constant 0 : i32
    return %c0_i32, %c0_i32_0, %c0_i32_1 : i32, i32, i32
  }
  func.func @transform_2(%arg0: i32) -> (i32, i32) {
    %c0_i32 = arith.constant 0 : i32
    %c0_i32_0 = arith.constant 0 : i32
    %c0_i32_1 = arith.constant 0 : i32
    return %c0_i32, %c0_i32_0 : i32, i32
  }
  func.func @transform_3(%arg0: i32) -> (i32, i32, i32) {
    %c0_i32 = arith.constant 0 : i32
    %c0_i32_0 = arith.constant 0 : i32
    %c0_i32_1 = arith.constant 0 : i32
    %c0_i32_2 = arith.constant 0 : i32
    return %c0_i32, %c0_i32_0, %c0_i32_1 : i32, i32, i32
  }
  func.func @transform_4(%arg0: i32) -> (i32, i32) {
    %c0_i32 = arith.constant 0 : i32
    %c0_i32_0 = arith.constant 0 : i32
    %c0_i32_1 = arith.constant 0 : i32
    return %c0_i32, %c0_i32_0 : i32, i32
  }
  func.func @transform_5(%arg0: i32) -> (i32, i32) {
    %c0_i32 = arith.constant 0 : i32
    %c0_i32_0 = arith.constant 0 : i32
    %c0_i32_1 = arith.constant 0 : i32
    return %c0_i32, %c0_i32_0 : i32, i32
  }
  func.func @transform_6(%arg0: i32) -> (i32, i32) {
    %c0_i32 = arith.constant 0 : i32
    %c0_i32_0 = arith.constant 0 : i32
    %c0_i32_1 = arith.constant 0 : i32
    return %c0_i32, %c0_i32_0 : i32, i32
  }
  func.func @transform_7(%arg0: i32) -> (i32, i32, i32) {
    %c0_i32 = arith.constant 0 : i32
    %c0_i32_0 = arith.constant 0 : i32
    %c0_i32_1 = arith.constant 0 : i32
    %c0_i32_2 = arith.constant 0 : i32
    return %c0_i32, %c0_i32_0, %c0_i32_1 : i32, i32, i32
  }
  func.func @transform_8(%arg0: i32) -> (i32, i32) {
    %c0_i32 = arith.constant 0 : i32
    %c0_i32_0 = arith.constant 0 : i32
    %c0_i32_1 = arith.constant 0 : i32
    return %c0_i32, %c0_i32_0 : i32, i32
  }
  func.func @transform_9(%arg0: i32) -> (i32, i32, i32) {
    %c0_i32 = arith.constant 0 : i32
    %c0_i32_0 = arith.constant 0 : i32
    %c0_i32_1 = arith.constant 0 : i32
    %c0_i32_2 = arith.constant 0 : i32
    return %c0_i32, %c0_i32_0, %c0_i32_1 : i32, i32, i32
  }
  func.func @transform_10(%arg0: i32) -> (i32, i32) {
    %c0_i32 = arith.constant 0 : i32
    %c0_i32_0 = arith.constant 0 : i32
    %c0_i32_1 = arith.constant 0 : i32
    return %c0_i32, %c0_i32_0 : i32, i32
  }
  func.func @transform_11(%arg0: i32) -> (i32, i32, i32) {
    %c0_i32 = arith.constant 0 : i32
    %c0_i32_0 = arith.constant 0 : i32
    %c0_i32_1 = arith.constant 0 : i32
    %c0_i32_2 = arith.constant 0 : i32
    return %c0_i32, %c0_i32_0, %c0_i32_1 : i32, i32, i32
  }
  func.func @transform_12(%arg0: i32) -> (i32, i32) {
    %c0_i32 = arith.constant 0 : i32
    %c0_i32_0 = arith.constant 0 : i32
    %c0_i32_1 = arith.constant 0 : i32
    return %c0_i32, %c0_i32_0 : i32, i32
  }
  func.func @transform_13(%arg0: i32) -> (i32, i32, i32) {
    %c0_i32 = arith.constant 0 : i32
    %c0_i32_0 = arith.constant 0 : i32
    %c0_i32_1 = arith.constant 0 : i32
    %c0_i32_2 = arith.constant 0 : i32
    return %c0_i32, %c0_i32_0, %c0_i32_1 : i32, i32, i32
  }
  func.func @transform_14(%arg0: i32) -> (i32, i32) {
    %c0_i32 = arith.constant 0 : i32
    %c0_i32_0 = arith.constant 0 : i32
    %c0_i32_1 = arith.constant 0 : i32
    return %c0_i32, %c0_i32_0 : i32, i32
  }
  func.func @transform_15(%arg0: i32) -> (i32, i32) {
    %c0_i32 = arith.constant 0 : i32
    %c0_i32_0 = arith.constant 0 : i32
    %c0_i32_1 = arith.constant 0 : i32
    return %c0_i32, %c0_i32_0 : i32, i32
  }
  func.func @transform_16(%arg0: i32) -> (i32, i32) {
    %c0_i32 = arith.constant 0 : i32
    %c0_i32_0 = arith.constant 0 : i32
    %c0_i32_1 = arith.constant 0 : i32
    return %c0_i32, %c0_i32_0 : i32, i32
  }
  func.func @transform_17(%arg0: i32) -> (i32, i32) {
    %c0_i32 = arith.constant 0 : i32
    %c0_i32_0 = arith.constant 0 : i32
    %c0_i32_1 = arith.constant 0 : i32
    return %c0_i32, %c0_i32_0 : i32, i32
  }
  func.func @transform_18(%arg0: i32) -> (i32, i32) {
    %c0_i32 = arith.constant 0 : i32
    %c0_i32_0 = arith.constant 0 : i32
    %c0_i32_1 = arith.constant 0 : i32
    return %c0_i32, %c0_i32_0 : i32, i32
  }
  func.func @transform_19(%arg0: i32) -> (i32, i32, i32) {
    %c0_i32 = arith.constant 0 : i32
    %c0_i32_0 = arith.constant 0 : i32
    %c0_i32_1 = arith.constant 0 : i32
    return %arg0, %c0_i32, %c0_i32_0 : i32, i32, i32
  }
}

</mosaic_0001>

<llo_original>
// kernel: tpu_custom_call.1
$region0: #{tpu_custom_call.1}
  #allocation0 [shape = 'u32[]', space=smem, size = 0x4, offset = 0x4, fixed_abs, tag = 'smem constant byte address 0x4 - core index']
  #allocation1 [shape = 'u32[144,128]{1,0:T(1,128)}', space=vmem, size = 0x12000, scoped, tag = 'internal scratch']
  %s0 = inlined_call_operand.vmem [shape: bf16[2,16,4], index: 0, kind: input, shape index: {}]
  %s1 = inlined_call_operand.hbm [shape: bf16[2,4,8], index: 1, kind: input, shape index: {}]
  %s2 = inlined_call_operand.vmem [shape: f32[1,8], index: 2, kind: input, shape index: {}]
  %s3 = inlined_call_operand.vmem [shape: bf16[2,8,8], index: 3, kind: input, shape index: {}]
  %s4 = inlined_call_operand.hbm [shape: f32[1,8], index: 4, kind: input, shape index: {}]
  %s5 = inlined_call_operand.hbm [shape: bf16[4,8], index: 5, kind: input, shape index: {}]
  %s6 = inlined_call_operand.hbm [shape: f32[1,8], index: 6, kind: input, shape index: {}]
  %s7 = inlined_call_operand.vmem [shape: bf16[2,8,8], index: 7, kind: input, shape index: {}]
  %s8 = inlined_call_operand.hbm [shape: f32[1,8], index: 8, kind: input, shape index: {}]
  %s9 = inlined_call_operand.vmem [shape: bf16[2,8,8], index: 9, kind: input, shape index: {}]
  %s10 = inlined_call_operand.hbm [shape: f32[1,8], index: 10, kind: input, shape index: {}]
  %s11 = inlined_call_operand.vmem [shape: bf16[2,8,16], index: 11, kind: input, shape index: {}]
  %s12 = inlined_call_operand.vmem [shape: f32[1,16], index: 12, kind: input, shape index: {}]
  %s13 = inlined_call_operand.vmem [shape: bf16[2,16,16], index: 13, kind: input, shape index: {}]
  %s14 = inlined_call_operand.vmem [shape: f32[1,16], index: 14, kind: input, shape index: {}]
  %s15 = inlined_call_operand.vmem [shape: bf16[8,16], index: 15, kind: input, shape index: {}]
  %s16 = inlined_call_operand.vmem [shape: f32[1,16], index: 16, kind: input, shape index: {}]
  %s17 = inlined_call_operand.vmem [shape: bf16[16,128], index: 17, kind: input, shape index: {}]
  %s18 = inlined_call_operand.vmem [shape: f32[1,128], index: 18, kind: input, shape index: {}]
  %s19 = inlined_call_operand.hbm [shape: f32[2,16,128], index: 19, kind: output, shape index: {}]
  %s20 = sld [smem:[#allocation0]]
  $region133: #{tpu_custom_call.1} parent=0
    _
  %s22 = ssub.s32 1, %s20
  %s23 = scalar_select 0, %s22, %s20
  $region1: #{tpu_custom_call.1} parent=0
    #allocation2 [shape = 'u8[2048]{0}', space=vmem, size = 0x800, scoped, tag = 'input window, operand 1, single buffered']
    #allocation3 [shape = 's32[2]{0}', space=sflag, size = 0x8, scoped, tag = 'scoped memory for tpu_custom_call.1']
    #allocation4 [shape = 's32[2]{0}', space=sflag, size = 0x8, scoped, tag = 'scoped memory for tpu_custom_call.1']
    #allocation5 [shape = 'u8[512]{0}', space=vmem, size = 0x400, scoped, tag = 'input window, operand 4, single buffered']
    #allocation6 [shape = 's32[1]{0}', space=sflag, size = 0x4, scoped, tag = 'scoped memory for tpu_custom_call.1']
    #allocation7 [shape = 'u8[1024]{0}', space=vmem, size = 0x400, scoped, tag = 'input window, operand 5, single buffered']
    #allocation8 [shape = 'u8[512]{0}', space=vmem, size = 0x400, scoped, tag = 'input window, operand 6, single buffered']
    #allocation9 [shape = 's32[1]{0}', space=sflag, size = 0x4, scoped, tag = 'scoped memory for tpu_custom_call.1']
    #allocation10 [shape = 'u8[512]{0}', space=vmem, size = 0x400, scoped, tag = 'input window, operand 8, single buffered']
    #allocation11 [shape = 'u8[512]{0}', space=vmem, size = 0x400, scoped, tag = 'input window, operand 10, single buffered']
    #allocation12 [shape = 's32[1]{0}', space=sflag, size = 0x4, scoped, tag = 'scoped memory for tpu_custom_call.1']
    #allocation13 [shape = 'u8[16384]{0}', space=vmem, size = 0x4000, scoped, tag = 'output window, operand 0']
    %24 = vsyncpa [#allocation3], 0
    %25 = vsyncpa [#allocation6], 0
    %26 = vsyncpa [#allocation9], 0
    %27 = vsyncpa [#allocation12], 0
    %28 = vsyncpa [#allocation4], 0
    %s29 = scalar_lea.sflag [#allocation4], 1
    %30 = vsyncpa %s29, 0
    loop: start=0, step=1, limit=4
    $region2: #{tpu_custom_call.1} parent=1 // loop_pre_header
      _
    $region3: #{tpu_custom_call.1} parent=1 // loop_header
      %s32 = sphi 0, %s36
      %p33 = scmp.ge.s32.totalorder %s32, 4
      %s42 = sphi 0, %s44
      %s45 = sphi 0, %s42
      %s46 = sphi 0, %s45
      %s62 = sphi 0, %s46
      %s66 = sphi 0, %s66
      %s68 = sphi 0, %s66
      %s69 = sphi 0, %s68
      %s83 = sphi 0, %s69
      %s87 = sphi 0, %s87
      %s89 = sphi 0, %s87
      %s90 = sphi 0, %s89
      %s104 = sphi 0, %s90
      %s108 = sphi 0, %s108
      %s110 = sphi 0, %s108
      %s111 = sphi 0, %s110
      %s125 = sphi 0, %s111
      %s129 = sphi 0, %s129
      %s131 = sphi 0, %s129
      %s132 = sphi 0, %s131
      %s146 = sphi 0, %s132
      %s150 = sphi 0, %s150
      %s152 = sphi 0, %s150
      %s153 = sphi 0, %s152
      %s167 = sphi 0, %s153
      %s171 = sphi 0, %s171
      %s173 = sphi 0, %s171
      %s174 = sphi 0, %s173
      %s188 = sphi 0, %s174
      %s192 = sphi 0, %s192
      %s194 = sphi 0, %s192
      %s195 = sphi 0, %s194
      %s209 = sphi 0, %s195
      %s213 = sphi 0, %s213
      %s215 = sphi 0, %s213
      %s216 = sphi 0, %s215
      %s230 = sphi 0, %s216
      %s234 = sphi 0, %s234
      %s236 = sphi 0, %s234
      %s237 = sphi 0, %s236
      %s251 = sphi 0, %s237
      %s255 = sphi 0, %s255
      %s257 = sphi 0, %s255
      %s258 = sphi 0, %s257
      %s272 = sphi 0, %s258
      %s276 = sphi 0, %s276
      %s278 = sphi 0, %s276
      %s279 = sphi 0, %s278
      %s293 = sphi 0, %s279
      %s297 = sphi 0, %s297
      %s299 = sphi 0, %s297
      %s300 = sphi 0, %s299
      %s314 = sphi 0, %s300
      %s318 = sphi 0, %s318
      %s320 = sphi 0, %s318
      %s321 = sphi 0, %s320
      %s335 = sphi 0, %s321
      %s339 = sphi 0, %s339
      %s341 = sphi 0, %s339
      %s342 = sphi 0, %s341
      %s356 = sphi 0, %s342
      %s360 = sphi 0, %s360
      %s362 = sphi 0, %s360
      %s363 = sphi 0, %s362
      %s377 = sphi 0, %s363
      %s381 = sphi 0, %s381
      %s383 = sphi 0, %s381
      %s384 = sphi 0, %s383
      %s398 = sphi 0, %s384
      %s402 = sphi 0, %s402
      %s404 = sphi 0, %s402
      %s405 = sphi 0, %s404
      %s419 = sphi 0, %s405
      %s423 = sphi 0, %s423
      %s425 = sphi 0, %s423
      %s426 = sphi 0, %s425
      %s440 = sphi 0, %s426
      %s446 = sphi 0, %s448
      %s449 = sphi 0, %s446
      %s450 = sphi 0, %s449
      %s466 = sphi 0, %s450
    $region4: #{tpu_custom_call.1} parent=1 // loop_header_branch
      %35 = sbr.rel (%p33) target = $region8
    $region5: #{tpu_custom_call.1} parent=1 // loop_body
      %s37 = ssub.s32 %s32, 1
      %s38 = ssub.s32 %s32, 2
      %s39 = sadd.s32 %s32, 1
      %s40 = ssub.s32 %s32, %s39
      %p41 = scmp.eq.s32.totalorder %s40, 0
      %s43 = sadd.s32 %s42, 1
      %s44 = scalar_select %p41, %s42, %s43
      %p47 = pneg %p41
      %p48 = scmp.eq.s32.totalorder %s32, 1
      %p49 = por %p47, %p48
      %p50 = scmp.ne.s32.totalorder %s42, %s45
      %p51 = scmp.eq.s32.totalorder %s32, 0
      %p52 = por %p50, %p51
      %p53 = scmp.ne.s32.totalorder %s42, %s45
      %p54 = scmp.eq.s32.totalorder %s37, 1
      %p55 = por %p53, %p54
      %p56 = scmp.ne.s32.totalorder %s45, %s46
      %p57 = scmp.eq.s32.totalorder %s37, 0
      %p58 = por %p56, %p57
      %p59 = scmp.ne.s32.totalorder %s45, %s46
      %p60 = scmp.eq.s32.totalorder %s38, 1
      %p61 = por %p59, %p60
      %p63 = scmp.ne.s32.totalorder %s46, %s62
      %p64 = scmp.eq.s32.totalorder %s38, 0
      %p65 = por %p63, %p64
      %s67 = sadd.s32 %s66, 1
      %p70 = scmp.eq.s32.totalorder %s32, 1
      %p71 = scmp.ne.s32.totalorder %s66, %s68
      %p72 = scmp.eq.s32.totalorder %s32, 0
      %p73 = por %p71, %p72
      %p74 = scmp.ne.s32.totalorder %s66, %s68
      %p75 = scmp.eq.s32.totalorder %s37, 1
      %p76 = por %p74, %p75
      %p77 = scmp.ne.s32.totalorder %s68, %s69
      %p78 = scmp.eq.s32.totalorder %s37, 0
      %p79 = por %p77, %p78
      %p80 = scmp.ne.s32.totalorder %s68, %s69
      %p81 = scmp.eq.s32.totalorder %s38, 1
      %p82 = por %p80, %p81
      %p84 = scmp.ne.s32.totalorder %s69, %s83
      %p85 = scmp.eq.s32.totalorder %s38, 0
      %p86 = por %p84, %p85
      %s88 = sadd.s32 %s87, 1
      %p91 = scmp.eq.s32.totalorder %s32, 1
      %p92 = scmp.ne.s32.totalorder %s87, %s89
      %p93 = scmp.eq.s32.totalorder %s32, 0
      %p94 = por %p92, %p93
      %p95 = scmp.ne.s32.totalorder %s87, %s89
      %p96 = scmp.eq.s32.totalorder %s37, 1
      %p97 = por %p95, %p96
      %p98 = scmp.ne.s32.totalorder %s89, %s90
      %p99 = scmp.eq.s32.totalorder %s37, 0
      %p100 = por %p98, %p99
      %p101 = scmp.ne.s32.totalorder %s89, %s90
      %p102 = scmp.eq.s32.totalorder %s38, 1
      %p103 = por %p101, %p102
      %p105 = scmp.ne.s32.totalorder %s90, %s104
      %p106 = scmp.eq.s32.totalorder %s38, 0
      %p107 = por %p105, %p106
      %s109 = sadd.s32 %s108, 1
      %p112 = scmp.eq.s32.totalorder %s32, 1
      %p113 = scmp.ne.s32.totalorder %s108, %s110
      %p114 = scmp.eq.s32.totalorder %s32, 0
      %p115 = por %p113, %p114
      %p116 = scmp.ne.s32.totalorder %s108, %s110
      %p117 = scmp.eq.s32.totalorder %s37, 1
      %p118 = por %p116, %p117
      %p119 = scmp.ne.s32.totalorder %s110, %s111
      %p120 = scmp.eq.s32.totalorder %s37, 0
      %p121 = por %p119, %p120
      %p122 = scmp.ne.s32.totalorder %s110, %s111
      %p123 = scmp.eq.s32.totalorder %s38, 1
      %p124 = por %p122, %p123
      %p126 = scmp.ne.s32.totalorder %s111, %s125
      %p127 = scmp.eq.s32.totalorder %s38, 0
      %p128 = por %p126, %p127
      %s130 = sadd.s32 %s129, 1
      %p133 = scmp.eq.s32.totalorder %s32, 1
      %p134 = scmp.ne.s32.totalorder %s129, %s131
      %p135 = scmp.eq.s32.totalorder %s32, 0
      %p136 = por %p134, %p135
      %p137 = scmp.ne.s32.totalorder %s129, %s131
      %p138 = scmp.eq.s32.totalorder %s37, 1
      %p139 = por %p137, %p138
      %p140 = scmp.ne.s32.totalorder %s131, %s132
      %p141 = scmp.eq.s32.totalorder %s37, 0
      %p142 = por %p140, %p141
      %p143 = scmp.ne.s32.totalorder %s131, %s132
      %p144 = scmp.eq.s32.totalorder %s38, 1
      %p145 = por %p143, %p144
      %p147 = scmp.ne.s32.totalorder %s132, %s146
      %p148 = scmp.eq.s32.totalorder %s38, 0
      %p149 = por %p147, %p148
      %s151 = sadd.s32 %s150, 1
      %p154 = scmp.eq.s32.totalorder %s32, 1
      %p155 = scmp.ne.s32.totalorder %s150, %s152
      %p156 = scmp.eq.s32.totalorder %s32, 0
      %p157 = por %p155, %p156
      %p158 = scmp.ne.s32.totalorder %s150, %s152
      %p159 = scmp.eq.s32.totalorder %s37, 1
      %p160 = por %p158, %p159
      %p161 = scmp.ne.s32.totalorder %s152, %s153
      %p162 = scmp.eq.s32.totalorder %s37, 0
      %p163 = por %p161, %p162
      %p164 = scmp.ne.s32.totalorder %s152, %s153
      %p165 = scmp.eq.s32.totalorder %s38, 1
      %p166 = por %p164, %p165
      %p168 = scmp.ne.s32.totalorder %s153, %s167
      %p169 = scmp.eq.s32.totalorder %s38, 0
      %p170 = por %p168, %p169
      %s172 = sadd.s32 %s171, 1
      %p175 = scmp.eq.s32.totalorder %s32, 1
      %p176 = scmp.ne.s32.totalorder %s171, %s173
      %p177 = scmp.eq.s32.totalorder %s32, 0
      %p178 = por %p176, %p177
      %p179 = scmp.ne.s32.totalorder %s171, %s173
      %p180 = scmp.eq.s32.totalorder %s37, 1
      %p181 = por %p179, %p180
      %p182 = scmp.ne.s32.totalorder %s173, %s174
      %p183 = scmp.eq.s32.totalorder %s37, 0
      %p184 = por %p182, %p183
      %p185 = scmp.ne.s32.totalorder %s173, %s174
      %p186 = scmp.eq.s32.totalorder %s38, 1
      %p187 = por %p185, %p186
      %p189 = scmp.ne.s32.totalorder %s174, %s188
      %p190 = scmp.eq.s32.totalorder %s38, 0
      %p191 = por %p189, %p190
      %s193 = sadd.s32 %s192, 1
      %p196 = scmp.eq.s32.totalorder %s32, 1
      %p197 = scmp.ne.s32.totalorder %s192, %s194
      %p198 = scmp.eq.s32.totalorder %s32, 0
      %p199 = por %p197, %p198
      %p200 = scmp.ne.s32.totalorder %s192, %s194
      %p201 = scmp.eq.s32.totalorder %s37, 1
      %p202 = por %p200, %p201
      %p203 = scmp.ne.s32.totalorder %s194, %s195
      %p204 = scmp.eq.s32.totalorder %s37, 0
      %p205 = por %p203, %p204
      %p206 = scmp.ne.s32.totalorder %s194, %s195
      %p207 = scmp.eq.s32.totalorder %s38, 1
      %p208 = por %p206, %p207
      %p210 = scmp.ne.s32.totalorder %s195, %s209
      %p211 = scmp.eq.s32.totalorder %s38, 0
      %p212 = por %p210, %p211
      %s214 = sadd.s32 %s213, 1
      %p217 = scmp.eq.s32.totalorder %s32, 1
      %p218 = scmp.ne.s32.totalorder %s213, %s215
      %p219 = scmp.eq.s32.totalorder %s32, 0
      %p220 = por %p218, %p219
      %p221 = scmp.ne.s32.totalorder %s213, %s215
      %p222 = scmp.eq.s32.totalorder %s37, 1
      %p223 = por %p221, %p222
      %p224 = scmp.ne.s32.totalorder %s215, %s216
      %p225 = scmp.eq.s32.totalorder %s37, 0
      %p226 = por %p224, %p225
      %p227 = scmp.ne.s32.totalorder %s215, %s216
      %p228 = scmp.eq.s32.totalorder %s38, 1
      %p229 = por %p227, %p228
      %p231 = scmp.ne.s32.totalorder %s216, %s230
      %p232 = scmp.eq.s32.totalorder %s38, 0
      %p233 = por %p231, %p232
      %s235 = sadd.s32 %s234, 1
      %p238 = scmp.eq.s32.totalorder %s32, 1
      %p239 = scmp.ne.s32.totalorder %s234, %s236
      %p240 = scmp.eq.s32.totalorder %s32, 0
      %p241 = por %p239, %p240
      %p242 = scmp.ne.s32.totalorder %s234, %s236
      %p243 = scmp.eq.s32.totalorder %s37, 1
      %p244 = por %p242, %p243
      %p245 = scmp.ne.s32.totalorder %s236, %s237
      %p246 = scmp.eq.s32.totalorder %s37, 0
      %p247 = por %p245, %p246
      %p248 = scmp.ne.s32.totalorder %s236, %s237
      %p249 = scmp.eq.s32.totalorder %s38, 1
      %p250 = por %p248, %p249
      %p252 = scmp.ne.s32.totalorder %s237, %s251
      %p253 = scmp.eq.s32.totalorder %s38, 0
      %p254 = por %p252, %p253
      %s256 = sadd.s32 %s255, 1
      %p259 = scmp.eq.s32.totalorder %s32, 1
      %p260 = scmp.ne.s32.totalorder %s255, %s257
      %p261 = scmp.eq.s32.totalorder %s32, 0
      %p262 = por %p260, %p261
      %p263 = scmp.ne.s32.totalorder %s255, %s257
      %p264 = scmp.eq.s32.totalorder %s37, 1
      %p265 = por %p263, %p264
      %p266 = scmp.ne.s32.totalorder %s257, %s258
      %p267 = scmp.eq.s32.totalorder %s37, 0
      %p268 = por %p266, %p267
      %p269 = scmp.ne.s32.totalorder %s257, %s258
      %p270 = scmp.eq.s32.totalorder %s38, 1
      %p271 = por %p269, %p270
      %p273 = scmp.ne.s32.totalorder %s258, %s272
      %p274 = scmp.eq.s32.totalorder %s38, 0
      %p275 = por %p273, %p274
      %s277 = sadd.s32 %s276, 1
      %p280 = scmp.eq.s32.totalorder %s32, 1
      %p281 = scmp.ne.s32.totalorder %s276, %s278
      %p282 = scmp.eq.s32.totalorder %s32, 0
      %p283 = por %p281, %p282
      %p284 = scmp.ne.s32.totalorder %s276, %s278
      %p285 = scmp.eq.s32.totalorder %s37, 1
      %p286 = por %p284, %p285
      %p287 = scmp.ne.s32.totalorder %s278, %s279
      %p288 = scmp.eq.s32.totalorder %s37, 0
      %p289 = por %p287, %p288
      %p290 = scmp.ne.s32.totalorder %s278, %s279
      %p291 = scmp.eq.s32.totalorder %s38, 1
      %p292 = por %p290, %p291
      %p294 = scmp.ne.s32.totalorder %s279, %s293
      %p295 = scmp.eq.s32.totalorder %s38, 0
      %p296 = por %p294, %p295
      %s298 = sadd.s32 %s297, 1
      %p301 = scmp.eq.s32.totalorder %s32, 1
      %p302 = scmp.ne.s32.totalorder %s297, %s299
      %p303 = scmp.eq.s32.totalorder %s32, 0
      %p304 = por %p302, %p303
      %p305 = scmp.ne.s32.totalorder %s297, %s299
      %p306 = scmp.eq.s32.totalorder %s37, 1
      %p307 = por %p305, %p306
      %p308 = scmp.ne.s32.totalorder %s299, %s300
      %p309 = scmp.eq.s32.totalorder %s37, 0
      %p310 = por %p308, %p309
      %p311 = scmp.ne.s32.totalorder %s299, %s300
      %p312 = scmp.eq.s32.totalorder %s38, 1
      %p313 = por %p311, %p312
      %p315 = scmp.ne.s32.totalorder %s300, %s314
      %p316 = scmp.eq.s32.totalorder %s38, 0
      %p317 = por %p315, %p316
      %s319 = sadd.s32 %s318, 1
      %p322 = scmp.eq.s32.totalorder %s32, 1
      %p323 = scmp.ne.s32.totalorder %s318, %s320
      %p324 = scmp.eq.s32.totalorder %s32, 0
      %p325 = por %p323, %p324
      %p326 = scmp.ne.s32.totalorder %s318, %s320
      %p327 = scmp.eq.s32.totalorder %s37, 1
      %p328 = por %p326, %p327
      %p329 = scmp.ne.s32.totalorder %s320, %s321
      %p330 = scmp.eq.s32.totalorder %s37, 0
      %p331 = por %p329, %p330
      %p332 = scmp.ne.s32.totalorder %s320, %s321
      %p333 = scmp.eq.s32.totalorder %s38, 1
      %p334 = por %p332, %p333
      %p336 = scmp.ne.s32.totalorder %s321, %s335
      %p337 = scmp.eq.s32.totalorder %s38, 0
      %p338 = por %p336, %p337
      %s340 = sadd.s32 %s339, 1
      %p343 = scmp.eq.s32.totalorder %s32, 1
      %p344 = scmp.ne.s32.totalorder %s339, %s341
      %p345 = scmp.eq.s32.totalorder %s32, 0
      %p346 = por %p344, %p345
      %p347 = scmp.ne.s32.totalorder %s339, %s341
      %p348 = scmp.eq.s32.totalorder %s37, 1
      %p349 = por %p347, %p348
      %p350 = scmp.ne.s32.totalorder %s341, %s342
      %p351 = scmp.eq.s32.totalorder %s37, 0
      %p352 = por %p350, %p351
      %p353 = scmp.ne.s32.totalorder %s341, %s342
      %p354 = scmp.eq.s32.totalorder %s38, 1
      %p355 = por %p353, %p354
      %p357 = scmp.ne.s32.totalorder %s342, %s356
      %p358 = scmp.eq.s32.totalorder %s38, 0
      %p359 = por %p357, %p358
      %s361 = sadd.s32 %s360, 1
      %p364 = scmp.eq.s32.totalorder %s32, 1
      %p365 = scmp.ne.s32.totalorder %s360, %s362
      %p366 = scmp.eq.s32.totalorder %s32, 0
      %p367 = por %p365, %p366
      %p368 = scmp.ne.s32.totalorder %s360, %s362
      %p369 = scmp.eq.s32.totalorder %s37, 1
      %p370 = por %p368, %p369
      %p371 = scmp.ne.s32.totalorder %s362, %s363
      %p372 = scmp.eq.s32.totalorder %s37, 0
      %p373 = por %p371, %p372
      %p374 = scmp.ne.s32.totalorder %s362, %s363
      %p375 = scmp.eq.s32.totalorder %s38, 1
      %p376 = por %p374, %p375
      %p378 = scmp.ne.s32.totalorder %s363, %s377
      %p379 = scmp.eq.s32.totalorder %s38, 0
      %p380 = por %p378, %p379
      %s382 = sadd.s32 %s381, 1
      %p385 = scmp.eq.s32.totalorder %s32, 1
      %p386 = scmp.ne.s32.totalorder %s381, %s383
      %p387 = scmp.eq.s32.totalorder %s32, 0
      %p388 = por %p386, %p387
      %p389 = scmp.ne.s32.totalorder %s381, %s383
      %p390 = scmp.eq.s32.totalorder %s37, 1
      %p391 = por %p389, %p390
      %p392 = scmp.ne.s32.totalorder %s383, %s384
      %p393 = scmp.eq.s32.totalorder %s37, 0
      %p394 = por %p392, %p393
      %p395 = scmp.ne.s32.totalorder %s383, %s384
      %p396 = scmp.eq.s32.totalorder %s38, 1
      %p397 = por %p395, %p396
      %p399 = scmp.ne.s32.totalorder %s384, %s398
      %p400 = scmp.eq.s32.totalorder %s38, 0
      %p401 = por %p399, %p400
      %s403 = sadd.s32 %s402, 1
      %p406 = scmp.eq.s32.totalorder %s32, 1
      %p407 = scmp.ne.s32.totalorder %s402, %s404
      %p408 = scmp.eq.s32.totalorder %s32, 0
      %p409 = por %p407, %p408
      %p410 = scmp.ne.s32.totalorder %s402, %s404
      %p411 = scmp.eq.s32.totalorder %s37, 1
      %p412 = por %p410, %p411
      %p413 = scmp.ne.s32.totalorder %s404, %s405
      %p414 = scmp.eq.s32.totalorder %s37, 0
      %p415 = por %p413, %p414
      %p416 = scmp.ne.s32.totalorder %s404, %s405
      %p417 = scmp.eq.s32.totalorder %s38, 1
      %p418 = por %p416, %p417
      %p420 = scmp.ne.s32.totalorder %s405, %s419
      %p421 = scmp.eq.s32.totalorder %s38, 0
      %p422 = por %p420, %p421
      %s424 = sadd.s32 %s423, 1
      %p427 = scmp.eq.s32.totalorder %s32, 1
      %p428 = scmp.ne.s32.totalorder %s423, %s425
      %p429 = scmp.eq.s32.totalorder %s32, 0
      %p430 = por %p428, %p429
      %p431 = scmp.ne.s32.totalorder %s423, %s425
      %p432 = scmp.eq.s32.totalorder %s37, 1
      %p433 = por %p431, %p432
      %p434 = scmp.ne.s32.totalorder %s425, %s426
      %p435 = scmp.eq.s32.totalorder %s37, 0
      %p436 = por %p434, %p435
      %p437 = scmp.ne.s32.totalorder %s425, %s426
      %p438 = scmp.eq.s32.totalorder %s38, 1
      %p439 = por %p437, %p438
      %p441 = scmp.ne.s32.totalorder %s426, %s440
      %p442 = scmp.eq.s32.totalorder %s38, 0
      %p443 = por %p441, %p442
      %s444 = ssub.s32 %s32, %s39
      %p445 = scmp.eq.s32.totalorder %s444, 0
      %s447 = sadd.s32 %s446, 1
      %s448 = scalar_select %p445, %s446, %s447
      %p451 = pneg %p445
      %p452 = scmp.eq.s32.totalorder %s32, 1
      %p453 = por %p451, %p452
      %p454 = scmp.ne.s32.totalorder %s446, %s449
      %p455 = scmp.eq.s32.totalorder %s32, 0
      %p456 = por %p454, %p455
      %p457 = scmp.ne.s32.totalorder %s446, %s449
      %p458 = scmp.eq.s32.totalorder %s37, 1
      %p459 = por %p457, %p458
      %p460 = scmp.ne.s32.totalorder %s449, %s450
      %p461 = scmp.eq.s32.totalorder %s37, 0
      %p462 = por %p460, %p461
      %p463 = scmp.ne.s32.totalorder %s449, %s450
      %p464 = scmp.eq.s32.totalorder %s38, 1
      %p465 = por %p463, %p464
      %p467 = scmp.ne.s32.totalorder %s450, %s466
      %p468 = scmp.eq.s32.totalorder %s38, 0
      %p469 = por %p467, %p468
      %p470 = scmp.le.s32.totalorder 1, %s32
      %p471 = scmp.lt.s32.totalorder %s32, 3
      %p472 = pnand %p470, %p471
      %p473 = pneg %p472
      // Predicated region
      $region9: #{tpu_custom_call.1} parent=5 // pred_check
        _
      $region10: #{tpu_custom_call.1} parent=5 // pred_check_branch
        %475 = sbr.rel (%p472) target = $region12
      $region11: #{tpu_custom_call.1} parent=5 // pred_region
        %s476 = ssub.s32 %s32, 1
        // Predicated region
        $region13: #{tpu_custom_call.1} parent=11 // pred_check
          %p477 = pneg %p79
        $region14: #{tpu_custom_call.1} parent=11 // pred_check_branch
          %479 = sbr.rel (%p477) target = $region16
        $region15: #{tpu_custom_call.1} parent=11 // pred_region
          %s481 = ssub.s32 64, 64
          %482 = vsyncadd [#allocation3], %s481
          %s483 = sshll.u32 [#allocation2], 4
          %s484 = int_to_ptr.vmem [resolvable:$true] %s483
          %489 = dma.hbm_to_vmem [thread:$0]  %s1, 64, %s484, [#allocation3], 32, 32, 2
        $region16: #{tpu_custom_call.1} parent=11 // pred_fallthru
          _
        // Predicated region
        $region17: #{tpu_custom_call.1} parent=11 // pred_check
          %p490 = pneg %p100
        $region18: #{tpu_custom_call.1} parent=11 // pred_check_branch
          %492 = sbr.rel (%p490) target = $region20
        $region19: #{tpu_custom_call.1} parent=11 // pred_region
          _
        $region20: #{tpu_custom_call.1} parent=11 // pred_fallthru
          _
        // Predicated region
        $region21: #{tpu_custom_call.1} parent=11 // pred_check
          %p493 = pneg %p121
        $region22: #{tpu_custom_call.1} parent=11 // pred_check_branch
          %495 = sbr.rel (%p493) target = $region24
        $region23: #{tpu_custom_call.1} parent=11 // pred_region
          _
        $region24: #{tpu_custom_call.1} parent=11 // pred_fallthru
          _
        // Predicated region
        $region25: #{tpu_custom_call.1} parent=11 // pred_check
          %p496 = pneg %p142
        $region26: #{tpu_custom_call.1} parent=11 // pred_check_branch
          %498 = sbr.rel (%p496) target = $region28
        $region27: #{tpu_custom_call.1} parent=11 // pred_region
          %s500 = ssub.s32 16, 16
          %501 = vsyncadd [#allocation6], %s500
          %s503 = sshll.u32 [#allocation5], 4
          %s504 = int_to_ptr.vmem [resolvable:$true] %s503
          %506 = dma.hbm_to_vmem [thread:$0]  %s4, 16, %s504, [#allocation6]
        $region28: #{tpu_custom_call.1} parent=11 // pred_fallthru
          _
        // Predicated region
        $region29: #{tpu_custom_call.1} parent=11 // pred_check
          %p507 = pneg %p163
        $region30: #{tpu_custom_call.1} parent=11 // pred_check_branch
          %509 = sbr.rel (%p507) target = $region32
        $region31: #{tpu_custom_call.1} parent=11 // pred_region
          %s511 = ssub.s32 32, 32
          %512 = vsyncadd [#allocation6], %s511
          %s514 = sshll.u32 [#allocation7], 4
          %s515 = int_to_ptr.vmem [resolvable:$true] %s514
          %517 = dma.hbm_to_vmem [thread:$0]  %s5, 32, %s515, [#allocation6]
        $region32: #{tpu_custom_call.1} parent=11 // pred_fallthru
          _
        // Predicated region
        $region33: #{tpu_custom_call.1} parent=11 // pred_check
          %p518 = pneg %p184
        $region34: #{tpu_custom_call.1} parent=11 // pred_check_branch
          %520 = sbr.rel (%p518) target = $region36
        $region35: #{tpu_custom_call.1} parent=11 // pred_region
          %s522 = ssub.s32 16, 16
          %523 = vsyncadd [#allocation9], %s522
          %s525 = sshll.u32 [#allocation8], 4
          %s526 = int_to_ptr.vmem [resolvable:$true] %s525
          %528 = dma.hbm_to_vmem [thread:$0]  %s6, 16, %s526, [#allocation9]
        $region36: #{tpu_custom_call.1} parent=11 // pred_fallthru
          _
        // Predicated region
        $region37: #{tpu_custom_call.1} parent=11 // pred_check
          %p529 = pneg %p205
        $region38: #{tpu_custom_call.1} parent=11 // pred_check_branch
          %531 = sbr.rel (%p529) target = $region40
        $region39: #{tpu_custom_call.1} parent=11 // pred_region
          _
        $region40: #{tpu_custom_call.1} parent=11 // pred_fallthru
          _
        // Predicated region
        $region41: #{tpu_custom_call.1} parent=11 // pred_check
          %p532 = pneg %p226
        $region42: #{tpu_custom_call.1} parent=11 // pred_check_branch
          %534 = sbr.rel (%p532) target = $region44
        $region43: #{tpu_custom_call.1} parent=11 // pred_region
          %s536 = ssub.s32 16, 16
          %537 = vsyncadd [#allocation9], %s536
          %s539 = sshll.u32 [#allocation10], 4
          %s540 = int_to_ptr.vmem [resolvable:$true] %s539
          %542 = dma.hbm_to_vmem [thread:$0]  %s8, 16, %s540, [#allocation9]
        $region44: #{tpu_custom_call.1} parent=11 // pred_fallthru
          _
        // Predicated region
        $region45: #{tpu_custom_call.1} parent=11 // pred_check
          %p543 = pneg %p247
        $region46: #{tpu_custom_call.1} parent=11 // pred_check_branch
          %545 = sbr.rel (%p543) target = $region48
        $region47: #{tpu_custom_call.1} parent=11 // pred_region
          _
        $region48: #{tpu_custom_call.1} parent=11 // pred_fallthru
          _
        // Predicated region
        $region49: #{tpu_custom_call.1} parent=11 // pred_check
          %p546 = pneg %p268
        $region50: #{tpu_custom_call.1} parent=11 // pred_check_branch
          %548 = sbr.rel (%p546) target = $region52
        $region51: #{tpu_custom_call.1} parent=11 // pred_region
          %s550 = ssub.s32 16, 16
          %551 = vsyncadd [#allocation12], %s550
          %s553 = sshll.u32 [#allocation11], 4
          %s554 = int_to_ptr.vmem [resolvable:$true] %s553
          %556 = dma.hbm_to_vmem [thread:$0]  %s10, 16, %s554, [#allocation12]
        $region52: #{tpu_custom_call.1} parent=11 // pred_fallthru
          _
        // Predicated region
        $region53: #{tpu_custom_call.1} parent=11 // pred_check
          %p557 = pneg %p289
        $region54: #{tpu_custom_call.1} parent=11 // pred_check_branch
          %559 = sbr.rel (%p557) target = $region56
        $region55: #{tpu_custom_call.1} parent=11 // pred_region
          _
        $region56: #{tpu_custom_call.1} parent=11 // pred_fallthru
          _
        // Predicated region
        $region57: #{tpu_custom_call.1} parent=11 // pred_check
          %p560 = pneg %p310
        $region58: #{tpu_custom_call.1} parent=11 // pred_check_branch
          %562 = sbr.rel (%p560) target = $region60
        $region59: #{tpu_custom_call.1} parent=11 // pred_region
          _
        $region60: #{tpu_custom_call.1} parent=11 // pred_fallthru
          _
        // Predicated region
        $region61: #{tpu_custom_call.1} parent=11 // pred_check
          %p563 = pneg %p331
        $region62: #{tpu_custom_call.1} parent=11 // pred_check_branch
          %565 = sbr.rel (%p563) target = $region64
        $region63: #{tpu_custom_call.1} parent=11 // pred_region
          _
        $region64: #{tpu_custom_call.1} parent=11 // pred_fallthru
          _
        // Predicated region
        $region65: #{tpu_custom_call.1} parent=11 // pred_check
          %p566 = pneg %p352
        $region66: #{tpu_custom_call.1} parent=11 // pred_check_branch
          %568 = sbr.rel (%p566) target = $region68
        $region67: #{tpu_custom_call.1} parent=11 // pred_region
          _
        $region68: #{tpu_custom_call.1} parent=11 // pred_fallthru
          _
        // Predicated region
        $region69: #{tpu_custom_call.1} parent=11 // pred_check
          %p569 = pneg %p373
        $region70: #{tpu_custom_call.1} parent=11 // pred_check_branch
          %571 = sbr.rel (%p569) target = $region72
        $region71: #{tpu_custom_call.1} parent=11 // pred_region
          _
        $region72: #{tpu_custom_call.1} parent=11 // pred_fallthru
          _
        // Predicated region
        $region73: #{tpu_custom_call.1} parent=11 // pred_check
          %p572 = pneg %p394
        $region74: #{tpu_custom_call.1} parent=11 // pred_check_branch
          %574 = sbr.rel (%p572) target = $region76
        $region75: #{tpu_custom_call.1} parent=11 // pred_region
          _
        $region76: #{tpu_custom_call.1} parent=11 // pred_fallthru
          _
        // Predicated region
        $region77: #{tpu_custom_call.1} parent=11 // pred_check
          %p575 = pneg %p415
        $region78: #{tpu_custom_call.1} parent=11 // pred_check_branch
          %577 = sbr.rel (%p575) target = $region80
        $region79: #{tpu_custom_call.1} parent=11 // pred_region
          _
        $region80: #{tpu_custom_call.1} parent=11 // pred_fallthru
          _
        // Predicated region
        $region81: #{tpu_custom_call.1} parent=11 // pred_check
          %p578 = pneg %p436
        $region82: #{tpu_custom_call.1} parent=11 // pred_check_branch
          %580 = sbr.rel (%p578) target = $region84
        $region83: #{tpu_custom_call.1} parent=11 // pred_region
          _
        $region84: #{tpu_custom_call.1} parent=11 // pred_fallthru
          _
      $region12: #{tpu_custom_call.1} parent=5 // pred_fallthru
        _
      %p581 = scmp.lt.s32.totalorder %s32, 2
      // Predicated region
      $region85: #{tpu_custom_call.1} parent=5 // pred_check
        %p582 = pneg %p581
      $region86: #{tpu_custom_call.1} parent=5 // pred_check_branch
        %584 = sbr.rel (%p582) target = $region88
      $region87: #{tpu_custom_call.1} parent=5 // pred_region
        // Predicated region
        $region89: #{tpu_custom_call.1} parent=87 // pred_check
          %p585 = pneg %p52
        $region90: #{tpu_custom_call.1} parent=87 // pred_check_branch
          %587 = sbr.rel (%p585) target = $region92
        $region91: #{tpu_custom_call.1} parent=87 // pred_region
          %p588 = scmp.lt.s32.totalorder %s32, 1
          %s589 = scalar_select %p588, %s32, 1
          %s590 = smul.addr %s589, 2
          %s591 = smul.addr %s590, 4
          %s592 = scalar_lea.vmem %s0, %s591
        $region92: #{tpu_custom_call.1} parent=87 // pred_fallthru
          _
      $region88: #{tpu_custom_call.1} parent=5 // pred_fallthru
        _
      %p593 = scmp.le.s32.totalorder 1, %s32
      %p594 = scmp.lt.s32.totalorder %s32, 3
      %p595 = pnand %p593, %p594
      %p596 = pneg %p595
      // Predicated region
      $region93: #{tpu_custom_call.1} parent=5 // pred_check
        _
      $region94: #{tpu_custom_call.1} parent=5 // pred_check_branch
        %598 = sbr.rel (%p595) target = $region96
      $region95: #{tpu_custom_call.1} parent=5 // pred_region
        %s599 = ssub.s32 %s32, 1
        // Predicated region
        $region97: #{tpu_custom_call.1} parent=95 // pred_check
          %p600 = pneg %p79
        $region98: #{tpu_custom_call.1} parent=95 // pred_check_branch
          %602 = sbr.rel (%p600) target = $region100
        $region99: #{tpu_custom_call.1} parent=95 // pred_region
          %603 = dma.done [#allocation3], 64
        $region100: #{tpu_custom_call.1} parent=95 // pred_fallthru
          _
        // Predicated region
        $region101: #{tpu_custom_call.1} parent=95 // pred_check
          %p604 = pneg %p142
        $region102: #{tpu_custom_call.1} parent=95 // pred_check_branch
          %606 = sbr.rel (%p604) target = $region104
        $region103: #{tpu_custom_call.1} parent=95 // pred_region
          %607 = dma.done [#allocation6], 16
        $region104: #{tpu_custom_call.1} parent=95 // pred_fallthru
          _
        // Predicated region
        $region105: #{tpu_custom_call.1} parent=95 // pred_check
          %p608 = pneg %p163
        $region106: #{tpu_custom_call.1} parent=95 // pred_check_branch
          %610 = sbr.rel (%p608) target = $region108
        $region107: #{tpu_custom_call.1} parent=95 // pred_region
          %611 = dma.done [#allocation6], 32
        $region108: #{tpu_custom_call.1} parent=95 // pred_fallthru
          _
        // Predicated region
        $region109: #{tpu_custom_call.1} parent=95 // pred_check
          %p612 = pneg %p184
        $region110: #{tpu_custom_call.1} parent=95 // pred_check_branch
          %614 = sbr.rel (%p612) target = $region112
        $region111: #{tpu_custom_call.1} parent=95 // pred_region
          %615 = dma.done [#allocation9], 16
        $region112: #{tpu_custom_call.1} parent=95 // pred_fallthru
          _
        // Predicated region
        $region113: #{tpu_custom_call.1} parent=95 // pred_check
          %p616 = pneg %p226
        $region114: #{tpu_custom_call.1} parent=95 // pred_check_branch
          %618 = sbr.rel (%p616) target = $region116
        $region115: #{tpu_custom_call.1} parent=95 // pred_region
          %619 = dma.done [#allocation9], 16
        $region116: #{tpu_custom_call.1} parent=95 // pred_fallthru
          _
        // Predicated region
        $region117: #{tpu_custom_call.1} parent=95 // pred_check
          %p620 = pneg %p268
        $region118: #{tpu_custom_call.1} parent=95 // pred_check_branch
          %622 = sbr.rel (%p620) target = $region120
        $region119: #{tpu_custom_call.1} parent=95 // pred_region
          %623 = dma.done [#allocation12], 16
        $region120: #{tpu_custom_call.1} parent=95 // pred_fallthru
          _
        %p624 = scmp.lt.s32.totalorder %s37, 1
        %s625 = scalar_select %p624, %s37, 1
        %s626 = smul.addr %s625, 2
        %s627 = smul.addr %s626, 4
        %s628 = scalar_lea.vmem %s0, %s627
        %p629 = pneg %p58
        %p630 = pneg %p55
        %p631 = pneg %p79
        %p632 = pneg %p76
        %p633 = pneg %p100
        %p634 = pneg %p97
        %p635 = pneg %p121
        %p636 = pneg %p118
        %p637 = pneg %p142
        %p638 = pneg %p139
        %p639 = pneg %p163
        %p640 = pneg %p160
        %p641 = pneg %p184
        %p642 = pneg %p181
        %p643 = pneg %p205
        %p644 = pneg %p202
        %p645 = pneg %p226
        %p646 = pneg %p223
        %p647 = pneg %p247
        %p648 = pneg %p244
        %p649 = pneg %p268
        %p650 = pneg %p265
        %p651 = pneg %p289
        %p652 = pneg %p286
        %p653 = pneg %p310
        %p654 = pneg %p307
        %p655 = pneg %p331
        %p656 = pneg %p328
        %p657 = pneg %p352
        %p658 = pneg %p349
        %p659 = pneg %p373
        %p660 = pneg %p370
        %p661 = pneg %p394
        %p662 = pneg %p391
        %p663 = pneg %p415
        %p664 = pneg %p412
        %p665 = pneg %p436
        %p666 = pneg %p433
        %p667 = pneg %p462
        %p668 = pneg %p459
        %s669 = sand.u32 %s449, 1
        %s670 = scalar_lea.sflag [#allocation4], %s669
        %s671 = sand.u32 %s449, 1
        %s672 = smul.addr %s671, 16
        %s673 = scalar_lea.vmem [#allocation13], %s672
        %p674 = scmp.lt.s32.totalorder %s37, 1
        %s675 = scalar_select %p674, %s37, 1
        %s676 = smul.addr %s675, 2
        %s677 = smul.addr %s676, 4
        %s678 = scalar_lea.vmem %s0, %s677
        %v680 = vld [vmem:[%s678] sm:$0xf]
        %v681 = vld [vmem:[%s678 + $0x4] sm:$0xf]
        %v682 = vunpack.c.l.bf16 %v680
        %v683 = vunpack.c.l.bf16 %v681
        %v684 = vlaneseq
        %v685 = vshrl.u32 %v684, 7
        %v686 = vadd.s32 %v685, 8
        %vm687 = vcmp.ge.s32.totalorder %v685, 1
        %vm688 = vcmp.ge.s32.totalorder %v686, 1
        %v689 = vsel %vm687, 1, 0
        %v690 = vsel %vm688, 1, 0
        %v691 = vcvt.s32.f32 %v689
        %v692 = vcvt.s32.f32 %v690
        %vm693 = vcmp.ge.s32.totalorder %v685, 2
        %vm694 = vcmp.ge.s32.totalorder %v686, 2
        %v695 = vsel %vm693, 1, 0
        %v696 = vsel %vm694, 1, 0
        %v697 = vcvt.s32.f32 %v695
        %v698 = vcvt.s32.f32 %v696
        %vm699 = vcmp.ge.s32.totalorder %v685, 4
        %vm700 = vcmp.ge.s32.totalorder %v686, 4
        %v701 = vsel %vm699, 1, 0
        %v702 = vsel %vm700, 1, 0
        %v703 = vcvt.s32.f32 %v701
        %v704 = vcvt.s32.f32 %v702
        %v705 = vrot.slane %v682, 7
        %v706 = vrot.slane %v683, 7
        %vm707 = vcmp.lt.s32.totalorder %v685, 1
        %v708 = vsel %vm707, %v705, %v706
        %v709 = vsel %vm707, %v706, %v705
        %v710 = vmul.f32 %v709, %v691
        %v711 = vmul.f32 %v708, %v692
        %v712 = vpack.c.bf16 %v711, %v710
        %v713 = vld [vmem:[#allocation2] sm:$0x3]
        %s714 = scalar_lea.vmem [#allocation2], 2
        %v715 = vld [vmem:[%s714] sm:$0x3]
        %v718 = vunpack.c.l.b16 %v680
        %v719 = vunpack.c.l.b16 %v681
        %v720 = vpack.c.b16 %v719, %v718
        %vm721 = vcmask 31744
        %v723 = vsel %vm721, %v720, 0
        %vm725 = vcmask 1041408
        %v727 = vsel %vm725, %v715, 0
        %729 = vmatprep.subr.bf16.mxu0 0
        %730 = vmatpush1.bf16.msra.mxu0 %v727
        %731 = vmatprep.subr.bf16.mxu0 0
        %732 = vmatpush1.bf16.msra.mxu0 0
        %733 = vmatprep.subr.bf16.mxu0 0
        %734 = vmatpush1.bf16.msra.mxu0 0
        %735 = vmatprep.subr.bf16.mxu0 0
        %736 = vmatpush1.bf16.msra.mxu0 0
        %737 = vmatprep.subr.bf16.mxu0 0
        %738 = vmatpush1.bf16.msra.mxu0 0
        %739 = vmatprep.subr.bf16.mxu0 0
        %740 = vmatpush1.bf16.msra.mxu0 0
        %741 = vmatprep.subr.bf16.mxu0 0
        %742 = vmatpush1.bf16.msra.mxu0 0
        %743 = vmatprep.subr.bf16.mxu0 0
        %744 = vmatpush1.bf16.msra.mxu0 0
        %745 = vmatprep.subr.bf16.mxu0 0
        %746 = vmatpush1.bf16.msra.mxu0 0
        %747 = vmatprep.subr.bf16.mxu0 0
        %748 = vmatpush1.bf16.msra.mxu0 0
        %749 = vmatprep.subr.bf16.mxu0 0
        %750 = vmatpush1.bf16.msra.mxu0 0
        %751 = vmatprep.subr.bf16.mxu0 0
        %752 = vmatpush1.bf16.msra.mxu0 0
        %753 = vmatprep.subr.bf16.mxu0 0
        %754 = vmatpush1.bf16.msra.mxu0 0
        %755 = vmatprep.subr.bf16.mxu0 0
        %756 = vmatpush1.bf16.msra.mxu0 0
        %757 = vmatprep.subr.bf16.mxu0 0
        %758 = vmatpush1.bf16.msra.mxu0 0
        %759 = vmatprep.subr.bf16.mxu0 0
        %760 = vmatpush1.bf16.msra.mxu0 0
        %761 = vmatprep.mubr.bf16.mxu0 0
        %762 = vmatmul.mubr.bf16.gmra.mrb[0].mxu0 %v723
        %v763 = vpop.f32.mrb[0].mxu0
        %v764 = vadd.f32 0.0, %v763
        %v765 = vpop.f32.mrb[0].mxu0
        %v766 = vpop.f32.mrb[0].mxu0
        %v767 = vadd.f32 0.0, %v766
        %v768 = vpop.f32.mrb[0].mxu0
        %769 = vdwg.mxu0
        %v771 = vsel %vm721, %v712, 0
        %v774 = vsel %vm725, %v713, 0
        %776 = vmatprep.subr.bf16.mxu0 0
        %777 = vmatpush1.bf16.msra.mxu0 %v774
        %778 = vmatprep.subr.bf16.mxu0 0
        %779 = vmatpush1.bf16.msra.mxu0 0
        %780 = vmatprep.subr.bf16.mxu0 0
        %781 = vmatpush1.bf16.msra.mxu0 0
        %782 = vmatprep.subr.bf16.mxu0 0
        %783 = vmatpush1.bf16.msra.mxu0 0
        %784 = vmatprep.subr.bf16.mxu0 0
        %785 = vmatpush1.bf16.msra.mxu0 0
        %786 = vmatprep.subr.bf16.mxu0 0
        %787 = vmatpush1.bf16.msra.mxu0 0
        %788 = vmatprep.subr.bf16.mxu0 0
        %789 = vmatpush1.bf16.msra.mxu0 0
        %790 = vmatprep.subr.bf16.mxu0 0
        %791 = vmatpush1.bf16.msra.mxu0 0
        %792 = vmatprep.subr.bf16.mxu0 0
        %793 = vmatpush1.bf16.msra.mxu0 0
        %794 = vmatprep.subr.bf16.mxu0 0
        %795 = vmatpush1.bf16.msra.mxu0 0
        %796 = vmatprep.subr.bf16.mxu0 0
        %797 = vmatpush1.bf16.msra.mxu0 0
        %798 = vmatprep.subr.bf16.mxu0 0
        %799 = vmatpush1.bf16.msra.mxu0 0
        %800 = vmatprep.subr.bf16.mxu0 0
        %801 = vmatpush1.bf16.msra.mxu0 0
        %802 = vmatprep.subr.bf16.mxu0 0
        %803 = vmatpush1.bf16.msra.mxu0 0
        %804 = vmatprep.subr.bf16.mxu0 0
        %805 = vmatpush1.bf16.msra.mxu0 0
        %806 = vmatprep.subr.bf16.mxu0 0
        %807 = vmatpush1.bf16.msra.mxu0 0
        %808 = vmatprep.mubr.bf16.mxu0 0
        %809 = vmatmul.mubr.bf16.gmra.mrb[0].mxu0 %v771
        %v810 = vpop.f32.mrb[0].mxu0
        %v811 = vadd.f32 %v764, %v810
        %v812 = vpop.f32.mrb[0].mxu0
        %v813 = vpop.f32.mrb[0].mxu0
        %v814 = vadd.f32 %v767, %v813
        %v815 = vpop.f32.mrb[0].mxu0
        %816 = vdwg.mxu0
        %v817 = vld [vmem:[%s2] sm:$0x1]
        %v819 = vlaneseq
        %v820 = vshrl.u32 %v819, 7
        %v821 = vsub.s32 0, %v820
        %v822 = vrot.slane %v817, %v821
        %v824 = vadd.f32 %v811, %v822
        %v825 = vadd.f32 %v814, %v822
        %v826 = vmax.f32 %v824, 0.0
        %v827 = vmax.f32 %v825, 0.0
        %v828 = vrot.slane %v826, 7
        %v829 = vrot.slane %v827, 7
        %v830 = vsel %vm707, %v828, %v829
        %v831 = vsel %vm707, %v829, %v828
        %v832 = vmul.f32 %v831, %v691
        %v833 = vmul.f32 %v830, %v692
        %v834 = vpack.c.bf16 %v833, %v832
        %v835 = vld [vmem:[%s3] sm:$0xf]
        %v836 = vpack.c.bf16 %v827, %v826
        %s837 = scalar_lea.vmem %s3, 4
        %v838 = vld [vmem:[%s837] sm:$0xf]
        %vm839 = vcmask 64512
        %v841 = vsel %vm839, %v836, 0
        %vm843 = vcmask 1043456
        %v845 = vsel %vm843, %v838, 0
        %847 = vmatprep.subr.bf16.mxu0 0
        %848 = vmatpush1.bf16.msra.mxu0 %v845
        %849 = vmatprep.subr.bf16.mxu0 0
        %850 = vmatpush1.bf16.msra.mxu0 0
        %851 = vmatprep.subr.bf16.mxu0 0
        %852 = vmatpush1.bf16.msra.mxu0 0
        %853 = vmatprep.subr.bf16.mxu0 0
        %854 = vmatpush1.bf16.msra.mxu0 0
        %855 = vmatprep.subr.bf16.mxu0 0
        %856 = vmatpush1.bf16.msra.mxu0 0
        %857 = vmatprep.subr.bf16.mxu0 0
        %858 = vmatpush1.bf16.msra.mxu0 0
        %859 = vmatprep.subr.bf16.mxu0 0
        %860 = vmatpush1.bf16.msra.mxu0 0
        %861 = vmatprep.subr.bf16.mxu0 0
        %862 = vmatpush1.bf16.msra.mxu0 0
        %863 = vmatprep.subr.bf16.mxu0 0
        %864 = vmatpush1.bf16.msra.mxu0 0
        %865 = vmatprep.subr.bf16.mxu0 0
        %866 = vmatpush1.bf16.msra.mxu0 0
        %867 = vmatprep.subr.bf16.mxu0 0
        %868 = vmatpush1.bf16.msra.mxu0 0
        %869 = vmatprep.subr.bf16.mxu0 0
        %870 = vmatpush1.bf16.msra.mxu0 0
        %871 = vmatprep.subr.bf16.mxu0 0
        %872 = vmatpush1.bf16.msra.mxu0 0
        %873 = vmatprep.subr.bf16.mxu0 0
        %874 = vmatpush1.bf16.msra.mxu0 0
        %875 = vmatprep.subr.bf16.mxu0 0
        %876 = vmatpush1.bf16.msra.mxu0 0
        %877 = vmatprep.subr.bf16.mxu0 0
        %878 = vmatpush1.bf16.msra.mxu0 0
        %879 = vmatprep.mubr.bf16.mxu0 0
        %880 = vmatmul.mubr.bf16.gmra.mrb[0].mxu0 %v841
        %v881 = vpop.f32.mrb[0].mxu0
        %v882 = vadd.f32 0.0, %v881
        %v883 = vpop.f32.mrb[0].mxu0
        %v884 = vpop.f32.mrb[0].mxu0
        %v885 = vadd.f32 0.0, %v884
        %v886 = vpop.f32.mrb[0].mxu0
        %887 = vdwg.mxu0
        %v889 = vsel %vm839, %v834, 0
        %v892 = vsel %vm843, %v835, 0
        %894 = vmatprep.subr.bf16.mxu0 0
        %895 = vmatpush1.bf16.msra.mxu0 %v892
        %896 = vmatprep.subr.bf16.mxu0 0
        %897 = vmatpush1.bf16.msra.mxu0 0
        %898 = vmatprep.subr.bf16.mxu0 0
        %899 = vmatpush1.bf16.msra.mxu0 0
        %900 = vmatprep.subr.bf16.mxu0 0
        %901 = vmatpush1.bf16.msra.mxu0 0
        %902 = vmatprep.subr.bf16.mxu0 0
        %903 = vmatpush1.bf16.msra.mxu0 0
        %904 = vmatprep.subr.bf16.mxu0 0
        %905 = vmatpush1.bf16.msra.mxu0 0
        %906 = vmatprep.subr.bf16.mxu0 0
        %907 = vmatpush1.bf16.msra.mxu0 0
        %908 = vmatprep.subr.bf16.mxu0 0
        %909 = vmatpush1.bf16.msra.mxu0 0
        %910 = vmatprep.subr.bf16.mxu0 0
        %911 = vmatpush1.bf16.msra.mxu0 0
        %912 = vmatprep.subr.bf16.mxu0 0
        %913 = vmatpush1.bf16.msra.mxu0 0
        %914 = vmatprep.subr.bf16.mxu0 0
        %915 = vmatpush1.bf16.msra.mxu0 0
        %916 = vmatprep.subr.bf16.mxu0 0
        %917 = vmatpush1.bf16.msra.mxu0 0
        %918 = vmatprep.subr.bf16.mxu0 0
        %919 = vmatpush1.bf16.msra.mxu0 0
        %920 = vmatprep.subr.bf16.mxu0 0
        %921 = vmatpush1.bf16.msra.mxu0 0
        %922 = vmatprep.subr.bf16.mxu0 0
        %923 = vmatpush1.bf16.msra.mxu0 0
        %924 = vmatprep.subr.bf16.mxu0 0
        %925 = vmatpush1.bf16.msra.mxu0 0
        %926 = vmatprep.mubr.bf16.mxu0 0
        %927 = vmatmul.mubr.bf16.gmra.mrb[0].mxu0 %v889
        %v928 = vpop.f32.mrb[0].mxu0
        %v929 = vadd.f32 %v882, %v928
        %v930 = vpop.f32.mrb[0].mxu0
        %v931 = vpop.f32.mrb[0].mxu0
        %v932 = vadd.f32 %v885, %v931
        %v933 = vpop.f32.mrb[0].mxu0
        %934 = vdwg.mxu0
        %v935 = vld [vmem:[#allocation5] sm:$0x1]
        %v937 = vlaneseq
        %v938 = vshrl.u32 %v937, 7
        %v939 = vsub.s32 0, %v938
        %v940 = vrot.slane %v935, %v939
        %v942 = vadd.f32 %v929, %v940
        %v943 = vadd.f32 %v932, %v940
        %v944 = vmax.f32 %v942, 0.0
        %v945 = vmax.f32 %v943, 0.0
        %v946 = vld [vmem:[#allocation7] sm:$0x3]
        %v947 = vld [vmem:[#allocation8] sm:$0x1]
        %v949 = vlaneseq
        %v950 = vshrl.u32 %v949, 7
        %v951 = vsub.s32 0, %v950
        %v952 = vrot.slane %v947, %v951
        %v955 = vsel %vm725, %v946, 0
        %957 = vmatprep.subr.bf16.mxu0 0
        %958 = vmatpush1.bf16.msra.mxu0 %v955
        %959 = vmatprep.subr.bf16.mxu0 0
        %960 = vmatpush1.bf16.msra.mxu0 0
        %961 = vmatprep.subr.bf16.mxu0 0
        %962 = vmatpush1.bf16.msra.mxu0 0
        %963 = vmatprep.subr.bf16.mxu0 0
        %964 = vmatpush1.bf16.msra.mxu0 0
        %965 = vmatprep.subr.bf16.mxu0 0
        %966 = vmatpush1.bf16.msra.mxu0 0
        %967 = vmatprep.subr.bf16.mxu0 0
        %968 = vmatpush1.bf16.msra.mxu0 0
        %969 = vmatprep.subr.bf16.mxu0 0
        %970 = vmatpush1.bf16.msra.mxu0 0
        %971 = vmatprep.subr.bf16.mxu0 0
        %972 = vmatpush1.bf16.msra.mxu0 0
        %973 = vmatprep.subr.bf16.mxu0 0
        %974 = vmatpush1.bf16.msra.mxu0 0
        %975 = vmatprep.subr.bf16.mxu0 0
        %976 = vmatpush1.bf16.msra.mxu0 0
        %977 = vmatprep.subr.bf16.mxu0 0
        %978 = vmatpush1.bf16.msra.mxu0 0
        %979 = vmatprep.subr.bf16.mxu0 0
        %980 = vmatpush1.bf16.msra.mxu0 0
        %981 = vmatprep.subr.bf16.mxu0 0
        %982 = vmatpush1.bf16.msra.mxu0 0
        %983 = vmatprep.subr.bf16.mxu0 0
        %984 = vmatpush1.bf16.msra.mxu0 0
        %985 = vmatprep.subr.bf16.mxu0 0
        %986 = vmatpush1.bf16.msra.mxu0 0
        %987 = vmatprep.subr.bf16.mxu0 0
        %988 = vmatpush1.bf16.msra.mxu0 0
        %989 = vmatprep.mubr.bf16.mxu0 0
        %990 = vmatmul.mubr.bf16.gmra.mrb[0].mxu0 %v723
        %v991 = vpop.f32.mrb[0].mxu0
        %v992 = vadd.f32 %v952, %v991
        %v993 = vpop.f32.mrb[0].mxu0
        %v994 = vpop.f32.mrb[0].mxu0
        %v995 = vadd.f32 %v952, %v994
        %v996 = vpop.f32.mrb[0].mxu0
        %997 = vdwg.mxu0
        %v998 = vadd.f32 %v944, %v992
        %v999 = vadd.f32 %v945, %v995
        %v1000 = vmax.f32 %v998, 0.0
        %v1001 = vmax.f32 %v999, 0.0
        %v1002 = vrot.slane %v1000, 6
        %v1003 = vrot.slane %v1001, 6
        %vm1004 = vcmp.lt.s32.totalorder %v685, 2
        %v1005 = vsel %vm1004, %v1002, %v1003
        %v1006 = vsel %vm1004, %v1003, %v1002
        %v1007 = vmul.f32 %v1006, %v697
        %v1008 = vmul.f32 %v1005, %v698
        %v1009 = vpack.c.bf16 %v1008, %v1007
        %v1010 = vld [vmem:[%s7] sm:$0xf]
        %v1011 = vpack.c.bf16 %v1001, %v1000
        %s1012 = scalar_lea.vmem %s7, 4
        %v1013 = vld [vmem:[%s1012] sm:$0xf]
        %v1015 = vsel %vm839, %v1011, 0
        %v1018 = vsel %vm843, %v1013, 0
        %1020 = vmatprep.subr.bf16.mxu0 0
        %1021 = vmatpush1.bf16.msra.mxu0 %v1018
        %1022 = vmatprep.subr.bf16.mxu0 0
        %1023 = vmatpush1.bf16.msra.mxu0 0
        %1024 = vmatprep.subr.bf16.mxu0 0
        %1025 = vmatpush1.bf16.msra.mxu0 0
        %1026 = vmatprep.subr.bf16.mxu0 0
        %1027 = vmatpush1.bf16.msra.mxu0 0
        %1028 = vmatprep.subr.bf16.mxu0 0
        %1029 = vmatpush1.bf16.msra.mxu0 0
        %1030 = vmatprep.subr.bf16.mxu0 0
        %1031 = vmatpush1.bf16.msra.mxu0 0
        %1032 = vmatprep.subr.bf16.mxu0 0
        %1033 = vmatpush1.bf16.msra.mxu0 0
        %1034 = vmatprep.subr.bf16.mxu0 0
        %1035 = vmatpush1.bf16.msra.mxu0 0
        %1036 = vmatprep.subr.bf16.mxu0 0
        %1037 = vmatpush1.bf16.msra.mxu0 0
        %1038 = vmatprep.subr.bf16.mxu0 0
        %1039 = vmatpush1.bf16.msra.mxu0 0
        %1040 = vmatprep.subr.bf16.mxu0 0
        %1041 = vmatpush1.bf16.msra.mxu0 0
        %1042 = vmatprep.subr.bf16.mxu0 0
        %1043 = vmatpush1.bf16.msra.mxu0 0
        %1044 = vmatprep.subr.bf16.mxu0 0
        %1045 = vmatpush1.bf16.msra.mxu0 0
        %1046 = vmatprep.subr.bf16.mxu0 0
        %1047 = vmatpush1.bf16.msra.mxu0 0
        %1048 = vmatprep.subr.bf16.mxu0 0
        %1049 = vmatpush1.bf16.msra.mxu0 0
        %1050 = vmatprep.subr.bf16.mxu0 0
        %1051 = vmatpush1.bf16.msra.mxu0 0
        %1052 = vmatprep.mubr.bf16.mxu0 0
        %1053 = vmatmul.mubr.bf16.gmra.mrb[0].mxu0 %v1015
        %v1054 = vpop.f32.mrb[0].mxu0
        %v1055 = vadd.f32 0.0, %v1054
        %v1056 = vpop.f32.mrb[0].mxu0
        %v1057 = vpop.f32.mrb[0].mxu0
        %v1058 = vadd.f32 0.0, %v1057
        %v1059 = vpop.f32.mrb[0].mxu0
        %1060 = vdwg.mxu0
        %v1062 = vsel %vm839, %v1009, 0
        %v1065 = vsel %vm843, %v1010, 0
        %1067 = vmatprep.subr.bf16.mxu0 0
        %1068 = vmatpush1.bf16.msra.mxu0 %v1065
        %1069 = vmatprep.subr.bf16.mxu0 0
        %1070 = vmatpush1.bf16.msra.mxu0 0
        %1071 = vmatprep.subr.bf16.mxu0 0
        %1072 = vmatpush1.bf16.msra.mxu0 0
        %1073 = vmatprep.subr.bf16.mxu0 0
        %1074 = vmatpush1.bf16.msra.mxu0 0
        %1075 = vmatprep.subr.bf16.mxu0 0
        %1076 = vmatpush1.bf16.msra.mxu0 0
        %1077 = vmatprep.subr.bf16.mxu0 0
        %1078 = vmatpush1.bf16.msra.mxu0 0
        %1079 = vmatprep.subr.bf16.mxu0 0
        %1080 = vmatpush1.bf16.msra.mxu0 0
        %1081 = vmatprep.subr.bf16.mxu0 0
        %1082 = vmatpush1.bf16.msra.mxu0 0
        %1083 = vmatprep.subr.bf16.mxu0 0
        %1084 = vmatpush1.bf16.msra.mxu0 0
        %1085 = vmatprep.subr.bf16.mxu0 0
        %1086 = vmatpush1.bf16.msra.mxu0 0
        %1087 = vmatprep.subr.bf16.mxu0 0
        %1088 = vmatpush1.bf16.msra.mxu0 0
        %1089 = vmatprep.subr.bf16.mxu0 0
        %1090 = vmatpush1.bf16.msra.mxu0 0
        %1091 = vmatprep.subr.bf16.mxu0 0
        %1092 = vmatpush1.bf16.msra.mxu0 0
        %1093 = vmatprep.subr.bf16.mxu0 0
        %1094 = vmatpush1.bf16.msra.mxu0 0
        %1095 = vmatprep.subr.bf16.mxu0 0
        %1096 = vmatpush1.bf16.msra.mxu0 0
        %1097 = vmatprep.subr.bf16.mxu0 0
        %1098 = vmatpush1.bf16.msra.mxu0 0
        %1099 = vmatprep.mubr.bf16.mxu0 0
        %1100 = vmatmul.mubr.bf16.gmra.mrb[0].mxu0 %v1062
        %v1101 = vpop.f32.mrb[0].mxu0
        %v1102 = vadd.f32 %v1055, %v1101
        %v1103 = vpop.f32.mrb[0].mxu0
        %v1104 = vpop.f32.mrb[0].mxu0
        %v1105 = vadd.f32 %v1058, %v1104
        %v1106 = vpop.f32.mrb[0].mxu0
        %1107 = vdwg.mxu0
        %v1108 = vld [vmem:[#allocation10] sm:$0x1]
        %v1110 = vlaneseq
        %v1111 = vshrl.u32 %v1110, 7
        %v1112 = vsub.s32 0, %v1111
        %v1113 = vrot.slane %v1108, %v1112
        %v1115 = vadd.f32 %v1102, %v1113
        %v1116 = vadd.f32 %v1105, %v1113
        %v1117 = vmax.f32 %v1115, 0.0
        %v1118 = vmax.f32 %v1116, 0.0
        %v1119 = vrot.slane %v1117, 6
        %v1120 = vrot.slane %v1118, 6
        %v1121 = vsel %vm1004, %v1119, %v1120
        %v1122 = vsel %vm1004, %v1120, %v1119
        %v1123 = vmul.f32 %v1122, %v697
        %v1124 = vmul.f32 %v1121, %v698
        %v1125 = vpack.c.bf16 %v1124, %v1123
        %v1126 = vld [vmem:[%s9] sm:$0xf]
        %v1127 = vpack.c.bf16 %v1118, %v1117
        %s1128 = scalar_lea.vmem %s9, 4
        %v1129 = vld [vmem:[%s1128] sm:$0xf]
        %v1131 = vsel %vm839, %v1127, 0
        %v1134 = vsel %vm843, %v1129, 0
        %1136 = vmatprep.subr.bf16.mxu0 0
        %1137 = vmatpush1.bf16.msra.mxu0 %v1134
        %1138 = vmatprep.subr.bf16.mxu0 0
        %1139 = vmatpush1.bf16.msra.mxu0 0
        %1140 = vmatprep.subr.bf16.mxu0 0
        %1141 = vmatpush1.bf16.msra.mxu0 0
        %1142 = vmatprep.subr.bf16.mxu0 0
        %1143 = vmatpush1.bf16.msra.mxu0 0
        %1144 = vmatprep.subr.bf16.mxu0 0
        %1145 = vmatpush1.bf16.msra.mxu0 0
        %1146 = vmatprep.subr.bf16.mxu0 0
        %1147 = vmatpush1.bf16.msra.mxu0 0
        %1148 = vmatprep.subr.bf16.mxu0 0
        %1149 = vmatpush1.bf16.msra.mxu0 0
        %1150 = vmatprep.subr.bf16.mxu0 0
        %1151 = vmatpush1.bf16.msra.mxu0 0
        %1152 = vmatprep.subr.bf16.mxu0 0
        %1153 = vmatpush1.bf16.msra.mxu0 0
        %1154 = vmatprep.subr.bf16.mxu0 0
        %1155 = vmatpush1.bf16.msra.mxu0 0
        %1156 = vmatprep.subr.bf16.mxu0 0
        %1157 = vmatpush1.bf16.msra.mxu0 0
        %1158 = vmatprep.subr.bf16.mxu0 0
        %1159 = vmatpush1.bf16.msra.mxu0 0
        %1160 = vmatprep.subr.bf16.mxu0 0
        %1161 = vmatpush1.bf16.msra.mxu0 0
        %1162 = vmatprep.subr.bf16.mxu0 0
        %1163 = vmatpush1.bf16.msra.mxu0 0
        %1164 = vmatprep.subr.bf16.mxu0 0
        %1165 = vmatpush1.bf16.msra.mxu0 0
        %1166 = vmatprep.subr.bf16.mxu0 0
        %1167 = vmatpush1.bf16.msra.mxu0 0
        %1168 = vmatprep.mubr.bf16.mxu0 0
        %1169 = vmatmul.mubr.bf16.gmra.mrb[0].mxu0 %v1131
        %v1170 = vpop.f32.mrb[0].mxu0
        %v1171 = vadd.f32 0.0, %v1170
        %v1172 = vpop.f32.mrb[0].mxu0
        %v1173 = vpop.f32.mrb[0].mxu0
        %v1174 = vadd.f32 0.0, %v1173
        %v1175 = vpop.f32.mrb[0].mxu0
        %1176 = vdwg.mxu0
        %v1178 = vsel %vm839, %v1125, 0
        %v1181 = vsel %vm843, %v1126, 0
        %1183 = vmatprep.subr.bf16.mxu0 0
        %1184 = vmatpush1.bf16.msra.mxu0 %v1181
        %1185 = vmatprep.subr.bf16.mxu0 0
        %1186 = vmatpush1.bf16.msra.mxu0 0
        %1187 = vmatprep.subr.bf16.mxu0 0
        %1188 = vmatpush1.bf16.msra.mxu0 0
        %1189 = vmatprep.subr.bf16.mxu0 0
        %1190 = vmatpush1.bf16.msra.mxu0 0
        %1191 = vmatprep.subr.bf16.mxu0 0
        %1192 = vmatpush1.bf16.msra.mxu0 0
        %1193 = vmatprep.subr.bf16.mxu0 0
        %1194 = vmatpush1.bf16.msra.mxu0 0
        %1195 = vmatprep.subr.bf16.mxu0 0
        %1196 = vmatpush1.bf16.msra.mxu0 0
        %1197 = vmatprep.subr.bf16.mxu0 0
        %1198 = vmatpush1.bf16.msra.mxu0 0
        %1199 = vmatprep.subr.bf16.mxu0 0
        %1200 = vmatpush1.bf16.msra.mxu0 0
        %1201 = vmatprep.subr.bf16.mxu0 0
        %1202 = vmatpush1.bf16.msra.mxu0 0
        %1203 = vmatprep.subr.bf16.mxu0 0
        %1204 = vmatpush1.bf16.msra.mxu0 0
        %1205 = vmatprep.subr.bf16.mxu0 0
        %1206 = vmatpush1.bf16.msra.mxu0 0
        %1207 = vmatprep.subr.bf16.mxu0 0
        %1208 = vmatpush1.bf16.msra.mxu0 0
        %1209 = vmatprep.subr.bf16.mxu0 0
        %1210 = vmatpush1.bf16.msra.mxu0 0
        %1211 = vmatprep.subr.bf16.mxu0 0
        %1212 = vmatpush1.bf16.msra.mxu0 0
        %1213 = vmatprep.subr.bf16.mxu0 0
        %1214 = vmatpush1.bf16.msra.mxu0 0
        %1215 = vmatprep.mubr.bf16.mxu0 0
        %1216 = vmatmul.mubr.bf16.gmra.mrb[0].mxu0 %v1178
        %v1217 = vpop.f32.mrb[0].mxu0
        %v1218 = vadd.f32 %v1171, %v1217
        %v1219 = vpop.f32.mrb[0].mxu0
        %v1220 = vpop.f32.mrb[0].mxu0
        %v1221 = vadd.f32 %v1174, %v1220
        %v1222 = vpop.f32.mrb[0].mxu0
        %1223 = vdwg.mxu0
        %v1224 = vld [vmem:[#allocation11] sm:$0x1]
        %v1226 = vlaneseq
        %v1227 = vshrl.u32 %v1226, 7
        %v1228 = vsub.s32 0, %v1227
        %v1229 = vrot.slane %v1224, %v1228
        %v1231 = vadd.f32 %v1218, %v1229
        %v1232 = vadd.f32 %v1221, %v1229
        %v1233 = vmax.f32 %v1231, 0.0
        %v1234 = vmax.f32 %v1232, 0.0
        %v1235 = vadd.f32 %v1233, %v1000
        %v1236 = vadd.f32 %v1234, %v1001
        %v1237 = vmax.f32 %v1235, 0.0
        %v1238 = vmax.f32 %v1236, 0.0
        %v1239 = vrot.slane %v1237, 4
        %v1240 = vrot.slane %v1238, 4
        %vm1241 = vcmp.lt.s32.totalorder %v685, 4
        %v1242 = vsel %vm1241, %v1239, %v1240
        %v1243 = vsel %vm1241, %v1240, %v1239
        %v1244 = vmul.f32 %v1243, %v703
        %v1245 = vmul.f32 %v1242, %v704
        %v1246 = vpack.c.bf16 %v1245, %v1244
        %v1247 = vld [vmem:[%s11] sm:$0xf]
        %v1248 = vpack.c.bf16 %v1238, %v1237
        %s1249 = scalar_lea.vmem %s11, 4
        %v1250 = vld [vmem:[%s1249] sm:$0xf]
        %v1252 = vsel %vm839, %v1248, 0
        %v1255 = vsel %vm843, %v1250, 0
        %1257 = vmatprep.subr.bf16.mxu0 0
        %1258 = vmatpush1.bf16.msra.mxu0 %v1255
        %1259 = vmatprep.subr.bf16.mxu0 0
        %1260 = vmatpush1.bf16.msra.mxu0 0
        %1261 = vmatprep.subr.bf16.mxu0 0
        %1262 = vmatpush1.bf16.msra.mxu0 0
        %1263 = vmatprep.subr.bf16.mxu0 0
        %1264 = vmatpush1.bf16.msra.mxu0 0
        %1265 = vmatprep.subr.bf16.mxu0 0
        %1266 = vmatpush1.bf16.msra.mxu0 0
        %1267 = vmatprep.subr.bf16.mxu0 0
        %1268 = vmatpush1.bf16.msra.mxu0 0
        %1269 = vmatprep.subr.bf16.mxu0 0
        %1270 = vmatpush1.bf16.msra.mxu0 0
        %1271 = vmatprep.subr.bf16.mxu0 0
        %1272 = vmatpush1.bf16.msra.mxu0 0
        %1273 = vmatprep.subr.bf16.mxu0 0
        %1274 = vmatpush1.bf16.msra.mxu0 0
        %1275 = vmatprep.subr.bf16.mxu0 0
        %1276 = vmatpush1.bf16.msra.mxu0 0
        %1277 = vmatprep.subr.bf16.mxu0 0
        %1278 = vmatpush1.bf16.msra.mxu0 0
        %1279 = vmatprep.subr.bf16.mxu0 0
        %1280 = vmatpush1.bf16.msra.mxu0 0
        %1281 = vmatprep.subr.bf16.mxu0 0
        %1282 = vmatpush1.bf16.msra.mxu0 0
        %1283 = vmatprep.subr.bf16.mxu0 0
        %1284 = vmatpush1.bf16.msra.mxu0 0
        %1285 = vmatprep.subr.bf16.mxu0 0
        %1286 = vmatpush1.bf16.msra.mxu0 0
        %1287 = vmatprep.subr.bf16.mxu0 0
        %1288 = vmatpush1.bf16.msra.mxu0 0
        %1289 = vmatprep.mubr.bf16.mxu0 0
        %1290 = vmatmul.mubr.bf16.gmra.mrb[0].mxu0 %v1252
        %v1291 = vpop.f32.mrb[0].mxu0
        %v1292 = vadd.f32 0.0, %v1291
        %v1293 = vpop.f32.mrb[0].mxu0
        %v1294 = vpop.f32.mrb[0].mxu0
        %v1295 = vadd.f32 0.0, %v1294
        %v1296 = vpop.f32.mrb[0].mxu0
        %1297 = vdwg.mxu0
        %v1299 = vsel %vm839, %v1246, 0
        %v1302 = vsel %vm843, %v1247, 0
        %1304 = vmatprep.subr.bf16.mxu0 0
        %1305 = vmatpush1.bf16.msra.mxu0 %v1302
        %1306 = vmatprep.subr.bf16.mxu0 0
        %1307 = vmatpush1.bf16.msra.mxu0 0
        %1308 = vmatprep.subr.bf16.mxu0 0
        %1309 = vmatpush1.bf16.msra.mxu0 0
        %1310 = vmatprep.subr.bf16.mxu0 0
        %1311 = vmatpush1.bf16.msra.mxu0 0
        %1312 = vmatprep.subr.bf16.mxu0 0
        %1313 = vmatpush1.bf16.msra.mxu0 0
        %1314 = vmatprep.subr.bf16.mxu0 0
        %1315 = vmatpush1.bf16.msra.mxu0 0
        %1316 = vmatprep.subr.bf16.mxu0 0
        %1317 = vmatpush1.bf16.msra.mxu0 0
        %1318 = vmatprep.subr.bf16.mxu0 0
        %1319 = vmatpush1.bf16.msra.mxu0 0
        %1320 = vmatprep.subr.bf16.mxu0 0
        %1321 = vmatpush1.bf16.msra.mxu0 0
        %1322 = vmatprep.subr.bf16.mxu0 0
        %1323 = vmatpush1.bf16.msra.mxu0 0
        %1324 = vmatprep.subr.bf16.mxu0 0
        %1325 = vmatpush1.bf16.msra.mxu0 0
        %1326 = vmatprep.subr.bf16.mxu0 0
        %1327 = vmatpush1.bf16.msra.mxu0 0
        %1328 = vmatprep.subr.bf16.mxu0 0
        %1329 = vmatpush1.bf16.msra.mxu0 0
        %1330 = vmatprep.subr.bf16.mxu0 0
        %1331 = vmatpush1.bf16.msra.mxu0 0
        %1332 = vmatprep.subr.bf16.mxu0 0
        %1333 = vmatpush1.bf16.msra.mxu0 0
        %1334 = vmatprep.subr.bf16.mxu0 0
        %1335 = vmatpush1.bf16.msra.mxu0 0
        %1336 = vmatprep.mubr.bf16.mxu0 0
        %1337 = vmatmul.mubr.bf16.gmra.mrb[0].mxu0 %v1299
        %v1338 = vpop.f32.mrb[0].mxu0
        %v1339 = vadd.f32 %v1292, %v1338
        %v1340 = vpop.f32.mrb[0].mxu0
        %v1341 = vpop.f32.mrb[0].mxu0
        %v1342 = vadd.f32 %v1295, %v1341
        %v1343 = vpop.f32.mrb[0].mxu0
        %1344 = vdwg.mxu0
        %v1345 = vld [vmem:[%s12] sm:$0x1]
        %v1347 = vlaneseq
        %v1348 = vshrl.u32 %v1347, 7
        %v1349 = vsub.s32 0, %v1348
        %v1350 = vrot.slane %v1345, %v1349
        %v1352 = vadd.f32 %v1339, %v1350
        %v1353 = vadd.f32 %v1342, %v1350
        %v1354 = vmax.f32 %v1352, 0.0
        %v1355 = vmax.f32 %v1353, 0.0
        %v1356 = vrot.slane %v1354, 4
        %v1357 = vrot.slane %v1355, 4
        %v1358 = vsel %vm1241, %v1356, %v1357
        %v1359 = vsel %vm1241, %v1357, %v1356
        %v1360 = vmul.f32 %v1359, %v703
        %v1361 = vmul.f32 %v1358, %v704
        %v1362 = vpack.c.bf16 %v1361, %v1360
        %v1363 = vld [vmem:[%s13] sm:$0xf]
        %v1364 = vld [vmem:[%s13 + $0x4] sm:$0xf]
        %v1365 = vpack.c.bf16 %v1355, %v1354
        %s1366 = scalar_lea.vmem %s13, 8
        %v1367 = vld [vmem:[%s1366] sm:$0xf]
        %v1368 = vld [vmem:[%s1366 + $0x4] sm:$0xf]
        %v1371 = vunpack.c.l.b16 %v1367
        %v1372 = vunpack.c.l.b16 %v1368
        %v1373 = vpack.c.b16 %v1372, %v1371
        %vm1375 = vcmask 130048
        %v1377 = vsel %vm1375, %v1365, 0
        %1379 = vmatprep.subr.bf16.mxu0 0
        %1380 = vmatpush1.bf16.msra.mxu0 %v1373
        %1381 = vmatprep.subr.bf16.mxu0 0
        %1382 = vmatpush1.bf16.msra.mxu0 0
        %1383 = vmatprep.subr.bf16.mxu0 0
        %1384 = vmatpush1.bf16.msra.mxu0 0
        %1385 = vmatprep.subr.bf16.mxu0 0
        %1386 = vmatpush1.bf16.msra.mxu0 0
        %1387 = vmatprep.subr.bf16.mxu0 0
        %1388 = vmatpush1.bf16.msra.mxu0 0
        %1389 = vmatprep.subr.bf16.mxu0 0
        %1390 = vmatpush1.bf16.msra.mxu0 0
        %1391 = vmatprep.subr.bf16.mxu0 0
        %1392 = vmatpush1.bf16.msra.mxu0 0
        %1393 = vmatprep.subr.bf16.mxu0 0
        %1394 = vmatpush1.bf16.msra.mxu0 0
        %1395 = vmatprep.subr.bf16.mxu0 0
        %1396 = vmatpush1.bf16.msra.mxu0 0
        %1397 = vmatprep.subr.bf16.mxu0 0
        %1398 = vmatpush1.bf16.msra.mxu0 0
        %1399 = vmatprep.subr.bf16.mxu0 0
        %1400 = vmatpush1.bf16.msra.mxu0 0
        %1401 = vmatprep.subr.bf16.mxu0 0
        %1402 = vmatpush1.bf16.msra.mxu0 0
        %1403 = vmatprep.subr.bf16.mxu0 0
        %1404 = vmatpush1.bf16.msra.mxu0 0
        %1405 = vmatprep.subr.bf16.mxu0 0
        %1406 = vmatpush1.bf16.msra.mxu0 0
        %1407 = vmatprep.subr.bf16.mxu0 0
        %1408 = vmatpush1.bf16.msra.mxu0 0
        %1409 = vmatprep.subr.bf16.mxu0 0
        %1410 = vmatpush1.bf16.msra.mxu0 0
        %1411 = vmatprep.mubr.bf16.mxu0 0
        %1412 = vmatmul.mubr.bf16.gmra.mrb[0].mxu0 %v1377
        %v1413 = vpop.f32.mrb[0].mxu0
        %v1414 = vadd.f32 0.0, %v1413
        %v1415 = vpop.f32.mrb[0].mxu0
        %v1416 = vpop.f32.mrb[0].mxu0
        %v1417 = vadd.f32 0.0, %v1416
        %v1418 = vpop.f32.mrb[0].mxu0
        %1419 = vdwg.mxu0
        %v1422 = vunpack.c.l.b16 %v1363
        %v1423 = vunpack.c.l.b16 %v1364
        %v1424 = vpack.c.b16 %v1423, %v1422
        %v1427 = vsel %vm1375, %v1362, 0
        %1429 = vmatprep.subr.bf16.mxu0 0
        %1430 = vmatpush1.bf16.msra.mxu0 %v1424
        %1431 = vmatprep.subr.bf16.mxu0 0
        %1432 = vmatpush1.bf16.msra.mxu0 0
        %1433 = vmatprep.subr.bf16.mxu0 0
        %1434 = vmatpush1.bf16.msra.mxu0 0
        %1435 = vmatprep.subr.bf16.mxu0 0
        %1436 = vmatpush1.bf16.msra.mxu0 0
        %1437 = vmatprep.subr.bf16.mxu0 0
        %1438 = vmatpush1.bf16.msra.mxu0 0
        %1439 = vmatprep.subr.bf16.mxu0 0
        %1440 = vmatpush1.bf16.msra.mxu0 0
        %1441 = vmatprep.subr.bf16.mxu0 0
        %1442 = vmatpush1.bf16.msra.mxu0 0
        %1443 = vmatprep.subr.bf16.mxu0 0
        %1444 = vmatpush1.bf16.msra.mxu0 0
        %1445 = vmatprep.subr.bf16.mxu0 0
        %1446 = vmatpush1.bf16.msra.mxu0 0
        %1447 = vmatprep.subr.bf16.mxu0 0
        %1448 = vmatpush1.bf16.msra.mxu0 0
        %1449 = vmatprep.subr.bf16.mxu0 0
        %1450 = vmatpush1.bf16.msra.mxu0 0
        %1451 = vmatprep.subr.bf16.mxu0 0
        %1452 = vmatpush1.bf16.msra.mxu0 0
        %1453 = vmatprep.subr.bf16.mxu0 0
        %1454 = vmatpush1.bf16.msra.mxu0 0
        %1455 = vmatprep.subr.bf16.mxu0 0
        %1456 = vmatpush1.bf16.msra.mxu0 0
        %1457 = vmatprep.subr.bf16.mxu0 0
        %1458 = vmatpush1.bf16.msra.mxu0 0
        %1459 = vmatprep.subr.bf16.mxu0 0
        %1460 = vmatpush1.bf16.msra.mxu0 0
        %1461 = vmatprep.mubr.bf16.mxu0 0
        %1462 = vmatmul.mubr.bf16.gmra.mrb[0].mxu0 %v1427
        %v1463 = vpop.f32.mrb[0].mxu0
        %v1464 = vadd.f32 %v1414, %v1463
        %v1465 = vpop.f32.mrb[0].mxu0
        %v1466 = vpop.f32.mrb[0].mxu0
        %v1467 = vadd.f32 %v1417, %v1466
        %v1468 = vpop.f32.mrb[0].mxu0
        %1469 = vdwg.mxu0
        %v1470 = vld [vmem:[%s14] sm:$0x1]
        %v1472 = vlaneseq
        %v1473 = vshrl.u32 %v1472, 7
        %v1474 = vsub.s32 0, %v1473
        %v1475 = vrot.slane %v1470, %v1474
        %v1477 = vadd.f32 %v1464, %v1475
        %v1478 = vadd.f32 %v1467, %v1475
        %v1479 = vmax.f32 %v1477, 0.0
        %v1480 = vmax.f32 %v1478, 0.0
        %v1481 = vld [vmem:[%s15] sm:$0xf]
        %v1482 = vld [vmem:[%s16] sm:$0x1]
        %v1484 = vlaneseq
        %v1485 = vshrl.u32 %v1484, 7
        %v1486 = vsub.s32 0, %v1485
        %v1487 = vrot.slane %v1482, %v1486
        %v1490 = vsel %vm843, %v1481, 0
        %1492 = vmatprep.subr.bf16.mxu0 0
        %1493 = vmatpush1.bf16.msra.mxu0 %v1490
        %1494 = vmatprep.subr.bf16.mxu0 0
        %1495 = vmatpush1.bf16.msra.mxu0 0
        %1496 = vmatprep.subr.bf16.mxu0 0
        %1497 = vmatpush1.bf16.msra.mxu0 0
        %1498 = vmatprep.subr.bf16.mxu0 0
        %1499 = vmatpush1.bf16.msra.mxu0 0
        %1500 = vmatprep.subr.bf16.mxu0 0
        %1501 = vmatpush1.bf16.msra.mxu0 0
        %1502 = vmatprep.subr.bf16.mxu0 0
        %1503 = vmatpush1.bf16.msra.mxu0 0
        %1504 = vmatprep.subr.bf16.mxu0 0
        %1505 = vmatpush1.bf16.msra.mxu0 0
        %1506 = vmatprep.subr.bf16.mxu0 0
        %1507 = vmatpush1.bf16.msra.mxu0 0
        %1508 = vmatprep.subr.bf16.mxu0 0
        %1509 = vmatpush1.bf16.msra.mxu0 0
        %1510 = vmatprep.subr.bf16.mxu0 0
        %1511 = vmatpush1.bf16.msra.mxu0 0
        %1512 = vmatprep.subr.bf16.mxu0 0
        %1513 = vmatpush1.bf16.msra.mxu0 0
        %1514 = vmatprep.subr.bf16.mxu0 0
        %1515 = vmatpush1.bf16.msra.mxu0 0
        %1516 = vmatprep.subr.bf16.mxu0 0
        %1517 = vmatpush1.bf16.msra.mxu0 0
        %1518 = vmatprep.subr.bf16.mxu0 0
        %1519 = vmatpush1.bf16.msra.mxu0 0
        %1520 = vmatprep.subr.bf16.mxu0 0
        %1521 = vmatpush1.bf16.msra.mxu0 0
        %1522 = vmatprep.subr.bf16.mxu0 0
        %1523 = vmatpush1.bf16.msra.mxu0 0
        %1524 = vmatprep.mubr.bf16.mxu0 0
        %1525 = vmatmul.mubr.bf16.gmra.mrb[0].mxu0 %v1252
        %v1526 = vpop.f32.mrb[0].mxu0
        %v1527 = vadd.f32 %v1487, %v1526
        %v1528 = vpop.f32.mrb[0].mxu0
        %v1529 = vpop.f32.mrb[0].mxu0
        %v1530 = vadd.f32 %v1487, %v1529
        %v1531 = vpop.f32.mrb[0].mxu0
        %1532 = vdwg.mxu0
        %v1533 = vadd.f32 %v1479, %v1527
        %v1534 = vadd.f32 %v1480, %v1530
        %v1535 = vmax.f32 %v1533, 0.0
        %v1536 = vmax.f32 %v1534, 0.0
        %v1537 = vld [vmem:[%s17] sm:$0xf]
        %v1538 = vld [vmem:[%s17 + $0x4] sm:$0xf]
        %v1539 = vld [vmem:[%s18] sm:$0x1]
        %v1540 = vpack.c.bf16 %v1536, %v1535
        %v1542 = vlaneseq
        %v1543 = vshrl.u32 %v1542, 7
        %v1544 = vsub.s32 0, %v1543
        %v1545 = vrot.slane %v1539, %v1544
        %v1549 = vunpack.c.l.b16 %v1537
        %v1550 = vunpack.c.l.b16 %v1538
        %v1551 = vpack.c.b16 %v1550, %v1549
        %v1554 = vsel %vm1375, %v1540, 0
        %1556 = vmatprep.subr.bf16.mxu0 0
        %1557 = vmatpush1.bf16.msra.mxu0 %v1551
        %1558 = vmatprep.subr.bf16.mxu0 0
        %1559 = vmatpush1.bf16.msra.mxu0 0
        %1560 = vmatprep.subr.bf16.mxu0 0
        %1561 = vmatpush1.bf16.msra.mxu0 0
        %1562 = vmatprep.subr.bf16.mxu0 0
        %1563 = vmatpush1.bf16.msra.mxu0 0
        %1564 = vmatprep.subr.bf16.mxu0 0
        %1565 = vmatpush1.bf16.msra.mxu0 0
        %1566 = vmatprep.subr.bf16.mxu0 0
        %1567 = vmatpush1.bf16.msra.mxu0 0
        %1568 = vmatprep.subr.bf16.mxu0 0
        %1569 = vmatpush1.bf16.msra.mxu0 0
        %1570 = vmatprep.subr.bf16.mxu0 0
        %1571 = vmatpush1.bf16.msra.mxu0 0
        %1572 = vmatprep.subr.bf16.mxu0 0
        %1573 = vmatpush1.bf16.msra.mxu0 0
        %1574 = vmatprep.subr.bf16.mxu0 0
        %1575 = vmatpush1.bf16.msra.mxu0 0
        %1576 = vmatprep.subr.bf16.mxu0 0
        %1577 = vmatpush1.bf16.msra.mxu0 0
        %1578 = vmatprep.subr.bf16.mxu0 0
        %1579 = vmatpush1.bf16.msra.mxu0 0
        %1580 = vmatprep.subr.bf16.mxu0 0
        %1581 = vmatpush1.bf16.msra.mxu0 0
        %1582 = vmatprep.subr.bf16.mxu0 0
        %1583 = vmatpush1.bf16.msra.mxu0 0
        %1584 = vmatprep.subr.bf16.mxu0 0
        %1585 = vmatpush1.bf16.msra.mxu0 0
        %1586 = vmatprep.subr.bf16.mxu0 0
        %1587 = vmatpush1.bf16.msra.mxu0 0
        %1588 = vmatprep.mubr.bf16.mxu0 0
        %1589 = vmatmul.mubr.bf16.gmra.mrb[0].mxu0 %v1554
        %v1590 = vpop.f32.mrb[0].mxu0
        %v1591 = vadd.f32 %v1545, %v1590
        %v1592 = vpop.f32.mrb[0].mxu0
        %v1593 = vpop.f32.mrb[0].mxu0
        %v1594 = vadd.f32 %v1545, %v1593
        %v1595 = vpop.f32.mrb[0].mxu0
        %1596 = vdwg.mxu0
        %1597 = vst [vmem:[%s673] sm:$0xff] %v1591
        %1598 = vst [vmem:[%s673 + $0x8] sm:$0xff] %v1594
        %s1599 = sand.u32 %s449, 1
        %s1600 = scalar_lea.sflag [#allocation4], %s1599
        %s1601 = sand.u32 %s449, 1
        %s1602 = smul.addr %s1601, 16
        %s1603 = scalar_lea.vmem [#allocation13], %s1602
        // Predicated region
        $region121: #{tpu_custom_call.1} parent=95 // pred_check
          %p1604 = pneg %p459
        $region122: #{tpu_custom_call.1} parent=95 // pred_check_branch
          %1606 = sbr.rel (%p1604) target = $region124
        $region123: #{tpu_custom_call.1} parent=95 // pred_region
          %s1608 = ssub.s32 256, 256
          %1609 = vsyncadd %s1600, %s1608
          %s1610 = smul.addr %s37, 2
          %s1611 = smul.addr %s1610, 128
          %s1612 = scalar_lea.hbm %s19, %s1611
          %s1613 = sshll.u32 %s1603, 4
          %s1614 = int_to_ptr.vmem [resolvable:$true] %s1613
          %1619 = dma.vmem_to_hbm [thread:$0]  %s1614, 256, %s1612, %s1600, 128, 128, 8
        $region124: #{tpu_custom_call.1} parent=95 // pred_fallthru
          _
      $region96: #{tpu_custom_call.1} parent=5 // pred_fallthru
        _
      %p1620 = scmp.le.s32.totalorder 2, %s32
      // Predicated region
      $region125: #{tpu_custom_call.1} parent=5 // pred_check
        %p1621 = pneg %p1620
      $region126: #{tpu_custom_call.1} parent=5 // pred_check_branch
        %1623 = sbr.rel (%p1621) target = $region128
      $region127: #{tpu_custom_call.1} parent=5 // pred_region
        %s1624 = ssub.s32 %s32, 2
        // Predicated region
        $region129: #{tpu_custom_call.1} parent=127 // pred_check
          %p1625 = pneg %p465
        $region130: #{tpu_custom_call.1} parent=127 // pred_check_branch
          %1627 = sbr.rel (%p1625) target = $region132
        $region131: #{tpu_custom_call.1} parent=127 // pred_region
          %s1628 = sand.u32 %s450, 1
          %s1629 = scalar_lea.sflag [#allocation4], %s1628
          %s1630 = sand.u32 %s450, 1
          %s1631 = smul.addr %s1630, 16
          %s1632 = scalar_lea.vmem [#allocation13], %s1631
          %1633 = dma.done %s1629, 256
        $region132: #{tpu_custom_call.1} parent=127 // pred_fallthru
          _
      $region128: #{tpu_custom_call.1} parent=5 // pred_fallthru
        _
    $region6: #{tpu_custom_call.1} parent=1 // loop_footer
      %s36 = sadd.s32 1, %s32
    $region7: #{tpu_custom_call.1} parent=1 // loop_footer_branch
      %31 = sbr.rel target = $region3
    $region8: #{tpu_custom_call.1} parent=1 // loop_exit
      _
    %1634 = vsyncpa [#allocation3], 1
    %s1635 = scalar_lea.sflag [#allocation3], 1
    %1636 = vsyncpa %s1635, 1
    %1637 = vsyncpa [#allocation6], 1
    %1638 = vsyncpa [#allocation9], 1
    %1639 = vsyncpa [#allocation12], 1
    %1640 = vsyncpa [#allocation4], 1
    %s1641 = scalar_lea.sflag [#allocation4], 1
    %1642 = vsyncpa %s1641, 1

</llo_original>
